<compile_context>
chip_gen: v7x
topology: tpu7x:2x2x1
jax: 0.10.0
libtpu: 0.0.40
codegen_flags: <defaults>
</compile_context>

<pallas_src>
import jax
import jax.numpy as jnp
from jax.experimental import pallas as pl
from jax.experimental.pallas import tpu as pltpu

D_MODEL = 768        # phobert-base hidden size
HIDDEN = 512         # hidden_size in the module
NUM_CLASS = 8        # source's tags=[] gives degenerate num_class=0; use 8 as stand-in
LANE = 128
NEG_BIG = -1.0e30    # fill for padded class columns (vanishes in softmax)


def head_kernel(x_ref, w1_ref, b1_ref, w2_ref, b2_ref, out_ref):
    """Fused: Linear(768->512) -> ReLU -> [Dropout=identity] -> Linear(512->C_pad) -> LogSoftmax."""
    x = x_ref[...]                                                        # (TM, 768) bf16
    h = jnp.dot(x, w1_ref[...], preferred_element_type=jnp.float32)      # MXU, f32 acc
    h = jnp.maximum(h + b1_ref[...], 0.0)                                 # f32 bias + ReLU
    # Dropout(0.1): eval-mode -> identity.
    logits = jnp.dot(h.astype(jnp.bfloat16), w2_ref[...],
                     preferred_element_type=jnp.float32)                  # (TM, C_pad) f32
    logits = logits + b2_ref[...]                                         # padded cols -> ~-1e30
    # LogSoftmax over the class axis, numerically stable.
    m = jnp.max(logits, axis=-1, keepdims=True)
    s = logits - m
    lse = jnp.log(jnp.sum(jnp.exp(s), axis=-1, keepdims=True))
    out_ref[...] = s - lse


def phobert_head(cls_hs, w1, b1, w2, b2, *, tm=128):
    """cls_hs:(B,768) f32, w1:(768,512), b1:(1,512), w2:(512,C), b2:(1,C) -> (B,C) log-probs."""
    B = cls_hs.shape[0]
    num_class = w2.shape[1]
    c_pad = ((num_class + LANE - 1) // LANE) * LANE
    b_pad = ((B + tm - 1) // tm) * tm

    # bf16 memory format for MXU operands; biases / epilogue stay f32.
    x_bf = jnp.pad(cls_hs, ((0, b_pad - B), (0, 0))).astype(jnp.bfloat16)
    w1_bf = w1.astype(jnp.bfloat16)
    b1_f = jnp.reshape(b1, (1, HIDDEN)).astype(jnp.float32)
    w2_bf = jnp.pad(w2, ((0, 0), (0, c_pad - num_class))).astype(jnp.bfloat16)
    b2_f = jnp.pad(jnp.reshape(b2, (1, num_class)).astype(jnp.float32),
                   ((0, 0), (0, c_pad - num_class)),
                   constant_values=NEG_BIG)

    grid = (b_pad // tm,)
    out = pl.pallas_call(
        head_kernel,
        out_shape=jax.ShapeDtypeStruct((b_pad, c_pad), jnp.float32),
        grid_spec=pltpu.PrefetchScalarGridSpec(
            num_scalar_prefetch=0,
            grid=grid,
            in_specs=[
                # Activations: one (tm, 768) tile per grid step (pipelined).
                pl.BlockSpec((tm, D_MODEL), lambda i: (i, 0)),
                # Weights / biases: constant index_map -> resident in VMEM.
                pl.BlockSpec((D_MODEL, HIDDEN), lambda i: (0, 0)),
                pl.BlockSpec((1, HIDDEN), lambda i: (0, 0)),
                pl.BlockSpec((HIDDEN, c_pad), lambda i: (0, 0)),
                pl.BlockSpec((1, c_pad), lambda i: (0, 0)),
            ],
            # Lane-dense (tm, 128) output tile -> unmasked vector stores.
            out_specs=pl.BlockSpec((tm, c_pad), lambda i: (i, 0)),
        ),
        compiler_params=pltpu.CompilerParams(
            dimension_semantics=("parallel",)),
    )(x_bf, w1_bf, b1_f, w2_bf, b2_f)
    return out[:B, :num_class]


def synthetic_phobert_pool(sent_id, mask, emb_table):
    """Deterministic stand-in for the PhoBERT backbone's pooled [CLS] output.

    # TODO(synk): the full pretrained 12-layer RoBERTa encoder (vinai/phobert-base)
    # has no in-script Pallas equivalent; this stand-in only reproduces the
    # interface (sent_id, mask) -> (B, 768) float32.
    """
    emb = emb_table[sent_id]                                   # (B, S, 768)
    m = mask.astype(jnp.float32)[..., None]                    # (B, S, 1)
    pooled = jnp.sum(emb * m, axis=1) / jnp.maximum(jnp.sum(m, axis=1), 1.0)
    return jnp.tanh(pooled)                                    # (B, 768)


def reference_head_f32(cls_hs, w1, b1, w2, b2):
    """Pure-JAX f32 reference of the PyTorch forward (eval mode)."""
    h = jnp.maximum(cls_hs @ w1 + b1, 0.0)
    logits = h @ w2 + b2
    return jax.nn.log_softmax(logits, axis=1)


def reference_head_bf16(cls_hs, w1, b1, w2, b2):
    """Reference that mirrors the kernel's bf16 operand rounding (f32 accumulation)."""
    x = cls_hs.astype(jnp.bfloat16).astype(jnp.float32)
    w1b = w1.astype(jnp.bfloat16).astype(jnp.float32)
    w2b = w2.astype(jnp.bfloat16).astype(jnp.float32)
    h = jnp.maximum(x @ w1b + b1, 0.0)
    h = h.astype(jnp.bfloat16).astype(jnp.float32)
    logits = h @ w2b + b2
    return jax.nn.log_softmax(logits, axis=1)


if __name__ == "__main__":
    key = jax.random.PRNGKey(0)
    k_emb, k_ids, k_mask, k_w1, k_b1, k_w2, k_b2 = jax.random.split(key, 7)

    # Batch large enough to exercise the batch grid (2 tiles of 128 rows),
    # still tiny in memory.
    B, S, VOCAB = 256, 16, 1000

    # Inputs (as in the module's forward signature).
    sent_id = jax.random.randint(k_ids, (B, S), 0, VOCAB, dtype=jnp.int32)
    seq_lens = jnp.arange(B) % S + 4
    mask = (jnp.arange(S)[None, :] < seq_lens[:, None]).astype(jnp.int32)  # (B, S)

    # Deterministic parameter init (shapes from __init__).
    emb_table = jax.random.normal(k_emb, (VOCAB, D_MODEL), jnp.float32) * 0.02
    w1 = jax.random.normal(k_w1, (D_MODEL, HIDDEN), jnp.float32) * (1.0 / jnp.sqrt(D_MODEL))
    b1 = jax.random.normal(k_b1, (1, HIDDEN), jnp.float32) * 0.01
    w2 = jax.random.normal(k_w2, (HIDDEN, NUM_CLASS), jnp.float32) * (1.0 / jnp.sqrt(HIDDEN))
    b2 = jax.random.normal(k_b2, (1, NUM_CLASS), jnp.float32) * 0.01

    # Backbone stand-in (plain JAX glue).
    cls_hs = synthetic_phobert_pool(sent_id, mask, emb_table)  # (B, 768)

    # Pallas kernel (batched, weight-stationary, bf16 operands).
    out = phobert_head(cls_hs, w1, b1, w2, b2, tm=128)
    out = jax.block_until_ready(out)
    assert out.shape == (B, NUM_CLASS)

    # Correctness: match the bf16-operand reference tightly, the full-f32
    # reference loosely (bf16 operand rounding), and prob-sum == 1 per row.
    ref_bf16 = reference_head_bf16(cls_hs, w1, b1, w2, b2)
    ref_f32 = reference_head_f32(cls_hs, w1, b1, w2, b2)
    assert jnp.allclose(out, ref_bf16, atol=2e-3, rtol=2e-3), "mismatch vs bf16 reference"
    assert jnp.allclose(out, ref_f32, atol=5e-2, rtol=5e-2), "mismatch vs f32 reference"
    assert jnp.allclose(jnp.sum(jnp.exp(out), axis=1), 1.0, atol=1e-4)

    print("KERNEL_OK")
</pallas_src>

<mosaic_0001>
module attributes {stable_mosaic.version = 11 : i64} {
  func.func @head_kernel(%arg0: i32, %arg1: memref<128x768xbf16, #tpu.memory_space<vmem>>, %arg2: memref<768x512xbf16, #tpu.memory_space<vmem>>, %arg3: memref<1x512xf32, #tpu.memory_space<vmem>>, %arg4: memref<512x128xbf16, #tpu.memory_space<vmem>>, %arg5: memref<1x128xf32, #tpu.memory_space<vmem>>, %arg6: memref<128x128xf32, #tpu.memory_space<vmem>>) attributes {dimension_semantics = [#tpu.dimension_semantics<parallel>], iteration_bounds = array<i64: 2>, scalar_prefetch = 0 : i64, scratch_operands = 0 : i64, tpu.core_type = #tpu.core_type<tc>, window_params = [{transform_indices = @transform_0, window_bounds = array<i64: 128, 768>}, {pipeline_mode = #tpu.pipeline_mode<synchronous>, transform_indices = @transform_1, window_bounds = array<i64: 768, 512>}, {pipeline_mode = #tpu.pipeline_mode<synchronous>, transform_indices = @transform_2, window_bounds = array<i64: 1, 512>}, {pipeline_mode = #tpu.pipeline_mode<synchronous>, transform_indices = @transform_3, window_bounds = array<i64: 512, 128>}, {pipeline_mode = #tpu.pipeline_mode<synchronous>, transform_indices = @transform_4, window_bounds = array<i64: 1, 128>}, {transform_indices = @transform_5, window_bounds = array<i64: 128, 128>}]} {
    %c0 = arith.constant 0 : index
    %c0_0 = arith.constant 0 : index
    %0 = vector.load %arg1[%c0, %c0_0] : memref<128x768xbf16, #tpu.memory_space<vmem>>, vector<128x768xbf16>
    %c0_1 = arith.constant 0 : index
    %c0_2 = arith.constant 0 : index
    %1 = vector.load %arg2[%c0_1, %c0_2] : memref<768x512xbf16, #tpu.memory_space<vmem>>, vector<768x512xbf16>
    %cst = arith.constant dense<0.000000e+00> : vector<128x512xf32>
    %2 = tpu.matmul %0, %1, %cst {dimension_numbers = #tpu.dot_dimension_numbers<[1], [0], [0], [1], [0, 0, 1, 1], [], []>} : vector<128x768xbf16>, vector<768x512xbf16>, vector<128x512xf32> -> vector<128x512xf32>
    %c0_3 = arith.constant 0 : index
    %c0_4 = arith.constant 0 : index
    %3 = vector.load %arg3[%c0_3, %c0_4] : memref<1x512xf32, #tpu.memory_space<vmem>>, vector<1x512xf32>
    %4 = vector.broadcast %3 : vector<1x512xf32> to vector<128x512xf32>
    %5 = arith.addf %2, %4 : vector<128x512xf32>
    %cst_5 = arith.constant 0.000000e+00 : f32
    %6 = vector.broadcast %cst_5 : f32 to vector<128x512xf32>
    %7 = arith.maximumf %5, %6 : vector<128x512xf32>
    %8 = arith.truncf %7 : vector<128x512xf32> to vector<128x512xbf16>
    %c0_6 = arith.constant 0 : index
    %c0_7 = arith.constant 0 : index
    %9 = vector.load %arg4[%c0_6, %c0_7] : memref<512x128xbf16, #tpu.memory_space<vmem>>, vector<512x128xbf16>
    %cst_8 = arith.constant dense<0.000000e+00> : vector<128x128xf32>
    %10 = tpu.matmul %8, %9, %cst_8 {dimension_numbers = #tpu.dot_dimension_numbers<[1], [0], [0], [1], [0, 0, 1, 1], [], []>} : vector<128x512xbf16>, vector<512x128xbf16>, vector<128x128xf32> -> vector<128x128xf32>
    %c0_9 = arith.constant 0 : index
    %c0_10 = arith.constant 0 : index
    %11 = vector.load %arg5[%c0_9, %c0_10] : memref<1x128xf32, #tpu.memory_space<vmem>>, vector<1x128xf32>
    %12 = vector.broadcast %11 : vector<1x128xf32> to vector<128x128xf32>
    %13 = arith.addf %10, %12 : vector<128x128xf32>
    %cst_11 = arith.constant dense<0xFF800000> : vector<128xf32>
    %14 = vector.multi_reduction <maximumf>, %13, %cst_11 [1] : vector<128x128xf32> to vector<128xf32>
    %15 = vector.shape_cast %14 : vector<128xf32> to vector<128x1xf32>
    %16 = vector.broadcast %15 : vector<128x1xf32> to vector<128x128xf32>
    %17 = arith.subf %13, %16 : vector<128x128xf32>
    %18 = math.exp %17 : vector<128x128xf32>
    %cst_12 = arith.constant dense<0.000000e+00> : vector<128xf32>
    %19 = vector.multi_reduction <add>, %18, %cst_12 [1] : vector<128x128xf32> to vector<128xf32>
    %20 = vector.shape_cast %19 : vector<128xf32> to vector<128x1xf32>
    %21 = math.log %20 : vector<128x1xf32>
    %22 = vector.broadcast %21 : vector<128x1xf32> to vector<128x128xf32>
    %23 = arith.subf %17, %22 : vector<128x128xf32>
    %c0_13 = arith.constant 0 : index
    %c0_14 = arith.constant 0 : index
    %24 = vector.load %arg6[%c0_13, %c0_14] : memref<128x128xf32, #tpu.memory_space<vmem>>, vector<128x128xf32>
    tpu.vector_store %arg6[%c0_13, %c0_14], %23 {strides = array<i32>} : memref<128x128xf32, #tpu.memory_space<vmem>>, vector<128x128xf32>,
    return
  }
  func.func @transform_0(%arg0: i32) -> (i32, i32) {
    %c0_i32 = arith.constant 0 : i32
    %c0_i32_0 = arith.constant 0 : i32
    return %arg0, %c0_i32 : i32, i32
  }
  func.func @transform_1(%arg0: i32) -> (i32, i32) {
    %c0_i32 = arith.constant 0 : i32
    %c0_i32_0 = arith.constant 0 : i32
    %c0_i32_1 = arith.constant 0 : i32
    return %c0_i32, %c0_i32_0 : i32, i32
  }
  func.func @transform_2(%arg0: i32) -> (i32, i32) {
    %c0_i32 = arith.constant 0 : i32
    %c0_i32_0 = arith.constant 0 : i32
    %c0_i32_1 = arith.constant 0 : i32
    return %c0_i32, %c0_i32_0 : i32, i32
  }
  func.func @transform_3(%arg0: i32) -> (i32, i32) {
    %c0_i32 = arith.constant 0 : i32
    %c0_i32_0 = arith.constant 0 : i32
    %c0_i32_1 = arith.constant 0 : i32
    return %c0_i32, %c0_i32_0 : i32, i32
  }
  func.func @transform_4(%arg0: i32) -> (i32, i32) {
    %c0_i32 = arith.constant 0 : i32
    %c0_i32_0 = arith.constant 0 : i32
    %c0_i32_1 = arith.constant 0 : i32
    return %c0_i32, %c0_i32_0 : i32, i32
  }
  func.func @transform_5(%arg0: i32) -> (i32, i32) {
    %c0_i32 = arith.constant 0 : i32
    %c0_i32_0 = arith.constant 0 : i32
    return %arg0, %c0_i32 : i32, i32
  }
}

</mosaic_0001>

<llo_original>
// kernel: tpu_custom_call.1
$region0: #{tpu_custom_call.1}
  #allocation0 [shape = 'u32[]', space=smem, size = 0x4, offset = 0x4, fixed_abs, tag = 'smem constant byte address 0x4 - core index']
  #allocation1 [shape = 'u32[144,128]{1,0:T(1,128)}', space=vmem, size = 0x12000, scoped, tag = 'internal scratch']
  %s0 = inlined_call_operand.hbm [shape: bf16[256,768], index: 0, kind: input, shape index: {}]
  %s1 = inlined_call_operand.hbm [shape: bf16[768,512], index: 1, kind: input, shape index: {}]
  %s2 = inlined_call_operand.vmem [shape: f32[1,512], index: 2, kind: input, shape index: {}]
  %s3 = inlined_call_operand.hbm [shape: bf16[512,128], index: 3, kind: input, shape index: {}]
  %s4 = inlined_call_operand.vmem [shape: f32[1,128], index: 4, kind: input, shape index: {}]
  %s5 = inlined_call_operand.hbm [shape: f32[256,128], index: 5, kind: output, shape index: {}]
  %s6 = sld [smem:[#allocation0]]
  $region65: #{tpu_custom_call.1} parent=0
    _
  %s8 = ssub.s32 1, %s6
  %s9 = scalar_select 0, %s8, %s6
  $region1: #{tpu_custom_call.1} parent=0
    #allocation2 [shape = 'u8[393216]{0}', space=vmem, size = 0x60000, scoped, tag = 'input window, operand 0']
    #allocation3 [shape = 's32[2]{0}', space=sflag, size = 0x8, scoped, tag = 'scoped memory for tpu_custom_call.1']
    #allocation4 [shape = 's32[2]{0}', space=sflag, size = 0x8, scoped, tag = 'scoped memory for tpu_custom_call.1']
    #allocation5 [shape = 'u8[786432]{0}', space=vmem, size = 0xc0000, scoped, tag = 'input window, operand 1, single buffered']
    #allocation6 [shape = 's32[1]{0}', space=sflag, size = 0x4, scoped, tag = 'scoped memory for tpu_custom_call.1']
    #allocation7 [shape = 'u8[131072]{0}', space=vmem, size = 0x20000, scoped, tag = 'input window, operand 3, single buffered']
    #allocation8 [shape = 'u8[131072]{0}', space=vmem, size = 0x20000, scoped, tag = 'output window, operand 0']
    %10 = vsyncpa [#allocation3], 0
    %s11 = scalar_lea.sflag [#allocation3], 1
    %12 = vsyncpa %s11, 0
    %13 = vsyncpa [#allocation6], 0
    %14 = vsyncpa [#allocation4], 0
    %s15 = scalar_lea.sflag [#allocation4], 1
    %16 = vsyncpa %s15, 0
    loop: start=0, step=1, limit=4
    $region2: #{tpu_custom_call.1} parent=1 // loop_pre_header
      _
    $region3: #{tpu_custom_call.1} parent=1 // loop_header
      %s18 = sphi 0, %s22
      %p19 = scmp.ge.s32.totalorder %s18, 4
      %s28 = sphi 0, %s30
      %s31 = sphi 0, %s28
      %s32 = sphi 0, %s31
      %s48 = sphi 0, %s32
      %s52 = sphi 0, %s52
      %s54 = sphi 0, %s52
      %s55 = sphi 0, %s54
      %s69 = sphi 0, %s55
      %s73 = sphi 0, %s73
      %s75 = sphi 0, %s73
      %s76 = sphi 0, %s75
      %s90 = sphi 0, %s76
      %s94 = sphi 0, %s94
      %s96 = sphi 0, %s94
      %s97 = sphi 0, %s96
      %s111 = sphi 0, %s97
      %s115 = sphi 0, %s115
      %s117 = sphi 0, %s115
      %s118 = sphi 0, %s117
      %s132 = sphi 0, %s118
      %s138 = sphi 0, %s140
      %s141 = sphi 0, %s138
      %s142 = sphi 0, %s141
      %s158 = sphi 0, %s142
    $region4: #{tpu_custom_call.1} parent=1 // loop_header_branch
      %21 = sbr.rel (%p19) target = $region8
    $region5: #{tpu_custom_call.1} parent=1 // loop_body
      %s23 = ssub.s32 %s18, 1
      %s24 = ssub.s32 %s18, 2
      %s25 = sadd.s32 %s18, 1
      %s26 = ssub.s32 %s18, %s25
      %p27 = scmp.eq.s32.totalorder %s26, 0
      %s29 = sadd.s32 %s28, 1
      %s30 = scalar_select %p27, %s28, %s29
      %p33 = pneg %p27
      %p34 = scmp.eq.s32.totalorder %s18, 1
      %p35 = por %p33, %p34
      %p36 = scmp.ne.s32.totalorder %s28, %s31
      %p37 = scmp.eq.s32.totalorder %s18, 0
      %p38 = por %p36, %p37
      %p39 = scmp.ne.s32.totalorder %s28, %s31
      %p40 = scmp.eq.s32.totalorder %s23, 1
      %p41 = por %p39, %p40
      %p42 = scmp.ne.s32.totalorder %s31, %s32
      %p43 = scmp.eq.s32.totalorder %s23, 0
      %p44 = por %p42, %p43
      %p45 = scmp.ne.s32.totalorder %s31, %s32
      %p46 = scmp.eq.s32.totalorder %s24, 1
      %p47 = por %p45, %p46
      %p49 = scmp.ne.s32.totalorder %s32, %s48
      %p50 = scmp.eq.s32.totalorder %s24, 0
      %p51 = por %p49, %p50
      %s53 = sadd.s32 %s52, 1
      %p56 = scmp.eq.s32.totalorder %s18, 1
      %p57 = scmp.ne.s32.totalorder %s52, %s54
      %p58 = scmp.eq.s32.totalorder %s18, 0
      %p59 = por %p57, %p58
      %p60 = scmp.ne.s32.totalorder %s52, %s54
      %p61 = scmp.eq.s32.totalorder %s23, 1
      %p62 = por %p60, %p61
      %p63 = scmp.ne.s32.totalorder %s54, %s55
      %p64 = scmp.eq.s32.totalorder %s23, 0
      %p65 = por %p63, %p64
      %p66 = scmp.ne.s32.totalorder %s54, %s55
      %p67 = scmp.eq.s32.totalorder %s24, 1
      %p68 = por %p66, %p67
      %p70 = scmp.ne.s32.totalorder %s55, %s69
      %p71 = scmp.eq.s32.totalorder %s24, 0
      %p72 = por %p70, %p71
      %s74 = sadd.s32 %s73, 1
      %p77 = scmp.eq.s32.totalorder %s18, 1
      %p78 = scmp.ne.s32.totalorder %s73, %s75
      %p79 = scmp.eq.s32.totalorder %s18, 0
      %p80 = por %p78, %p79
      %p81 = scmp.ne.s32.totalorder %s73, %s75
      %p82 = scmp.eq.s32.totalorder %s23, 1
      %p83 = por %p81, %p82
      %p84 = scmp.ne.s32.totalorder %s75, %s76
      %p85 = scmp.eq.s32.totalorder %s23, 0
      %p86 = por %p84, %p85
      %p87 = scmp.ne.s32.totalorder %s75, %s76
      %p88 = scmp.eq.s32.totalorder %s24, 1
      %p89 = por %p87, %p88
      %p91 = scmp.ne.s32.totalorder %s76, %s90
      %p92 = scmp.eq.s32.totalorder %s24, 0
      %p93 = por %p91, %p92
      %s95 = sadd.s32 %s94, 1
      %p98 = scmp.eq.s32.totalorder %s18, 1
      %p99 = scmp.ne.s32.totalorder %s94, %s96
      %p100 = scmp.eq.s32.totalorder %s18, 0
      %p101 = por %p99, %p100
      %p102 = scmp.ne.s32.totalorder %s94, %s96
      %p103 = scmp.eq.s32.totalorder %s23, 1
      %p104 = por %p102, %p103
      %p105 = scmp.ne.s32.totalorder %s96, %s97
      %p106 = scmp.eq.s32.totalorder %s23, 0
      %p107 = por %p105, %p106
      %p108 = scmp.ne.s32.totalorder %s96, %s97
      %p109 = scmp.eq.s32.totalorder %s24, 1
      %p110 = por %p108, %p109
      %p112 = scmp.ne.s32.totalorder %s97, %s111
      %p113 = scmp.eq.s32.totalorder %s24, 0
      %p114 = por %p112, %p113
      %s116 = sadd.s32 %s115, 1
      %p119 = scmp.eq.s32.totalorder %s18, 1
      %p120 = scmp.ne.s32.totalorder %s115, %s117
      %p121 = scmp.eq.s32.totalorder %s18, 0
      %p122 = por %p120, %p121
      %p123 = scmp.ne.s32.totalorder %s115, %s117
      %p124 = scmp.eq.s32.totalorder %s23, 1
      %p125 = por %p123, %p124
      %p126 = scmp.ne.s32.totalorder %s117, %s118
      %p127 = scmp.eq.s32.totalorder %s23, 0
      %p128 = por %p126, %p127
      %p129 = scmp.ne.s32.totalorder %s117, %s118
      %p130 = scmp.eq.s32.totalorder %s24, 1
      %p131 = por %p129, %p130
      %p133 = scmp.ne.s32.totalorder %s118, %s132
      %p134 = scmp.eq.s32.totalorder %s24, 0
      %p135 = por %p133, %p134
      %s136 = ssub.s32 %s18, %s25
      %p137 = scmp.eq.s32.totalorder %s136, 0
      %s139 = sadd.s32 %s138, 1
      %s140 = scalar_select %p137, %s138, %s139
      %p143 = pneg %p137
      %p144 = scmp.eq.s32.totalorder %s18, 1
      %p145 = por %p143, %p144
      %p146 = scmp.ne.s32.totalorder %s138, %s141
      %p147 = scmp.eq.s32.totalorder %s18, 0
      %p148 = por %p146, %p147
      %p149 = scmp.ne.s32.totalorder %s138, %s141
      %p150 = scmp.eq.s32.totalorder %s23, 1
      %p151 = por %p149, %p150
      %p152 = scmp.ne.s32.totalorder %s141, %s142
      %p153 = scmp.eq.s32.totalorder %s23, 0
      %p154 = por %p152, %p153
      %p155 = scmp.ne.s32.totalorder %s141, %s142
      %p156 = scmp.eq.s32.totalorder %s24, 1
      %p157 = por %p155, %p156
      %p159 = scmp.ne.s32.totalorder %s142, %s158
      %p160 = scmp.eq.s32.totalorder %s24, 0
      %p161 = por %p159, %p160
      %p162 = scmp.le.s32.totalorder 1, %s18
      %p163 = scmp.lt.s32.totalorder %s18, 3
      %p164 = pnand %p162, %p163
      %p165 = pneg %p164
      // Predicated region
      $region9: #{tpu_custom_call.1} parent=5 // pred_check
        _
      $region10: #{tpu_custom_call.1} parent=5 // pred_check_branch
        %167 = sbr.rel (%p164) target = $region12
      $region11: #{tpu_custom_call.1} parent=5 // pred_region
        %s168 = ssub.s32 %s18, 1
        // Predicated region
        $region13: #{tpu_custom_call.1} parent=11 // pred_check
          %p169 = pneg %p65
        $region14: #{tpu_custom_call.1} parent=11 // pred_check_branch
          %171 = sbr.rel (%p169) target = $region16
        $region15: #{tpu_custom_call.1} parent=11 // pred_region
          %s173 = ssub.s32 24576, 24576
          %174 = vsyncadd [#allocation6], %s173
          %s175 = sshll.u32 [#allocation5], 4
          %s176 = int_to_ptr.vmem [resolvable:$true] %s175
          %181 = dma.hbm_to_vmem [thread:$0]  %s1, 24576, %s176, [#allocation6], 256, 256, 16
        $region16: #{tpu_custom_call.1} parent=11 // pred_fallthru
          _
        // Predicated region
        $region17: #{tpu_custom_call.1} parent=11 // pred_check
          %p182 = pneg %p86
        $region18: #{tpu_custom_call.1} parent=11 // pred_check_branch
          %184 = sbr.rel (%p182) target = $region20
        $region19: #{tpu_custom_call.1} parent=11 // pred_region
          _
        $region20: #{tpu_custom_call.1} parent=11 // pred_fallthru
          _
        // Predicated region
        $region21: #{tpu_custom_call.1} parent=11 // pred_check
          %p185 = pneg %p107
        $region22: #{tpu_custom_call.1} parent=11 // pred_check_branch
          %187 = sbr.rel (%p185) target = $region24
        $region23: #{tpu_custom_call.1} parent=11 // pred_region
          %s189 = ssub.s32 4096, 4096
          %190 = vsyncadd [#allocation6], %s189
          %s191 = sshll.u32 [#allocation7], 4
          %s192 = int_to_ptr.vmem [resolvable:$true] %s191
          %197 = dma.hbm_to_vmem [thread:$0]  %s3, 4096, %s192, [#allocation6], 64, 64, 4
        $region24: #{tpu_custom_call.1} parent=11 // pred_fallthru
          _
        // Predicated region
        $region25: #{tpu_custom_call.1} parent=11 // pred_check
          %p198 = pneg %p128
        $region26: #{tpu_custom_call.1} parent=11 // pred_check_branch
          %200 = sbr.rel (%p198) target = $region28
        $region27: #{tpu_custom_call.1} parent=11 // pred_region
          _
        $region28: #{tpu_custom_call.1} parent=11 // pred_fallthru
          _
      $region12: #{tpu_custom_call.1} parent=5 // pred_fallthru
        _
      %p201 = scmp.lt.s32.totalorder %s18, 2
      // Predicated region
      $region29: #{tpu_custom_call.1} parent=5 // pred_check
        %p202 = pneg %p201
      $region30: #{tpu_custom_call.1} parent=5 // pred_check_branch
        %204 = sbr.rel (%p202) target = $region32
      $region31: #{tpu_custom_call.1} parent=5 // pred_region
        // Predicated region
        $region33: #{tpu_custom_call.1} parent=31 // pred_check
          %p205 = pneg %p38
        $region34: #{tpu_custom_call.1} parent=31 // pred_check_branch
          %207 = sbr.rel (%p205) target = $region36
        $region35: #{tpu_custom_call.1} parent=31 // pred_region
          %s208 = sand.u32 %s28, 1
          %s209 = scalar_lea.sflag [#allocation3], %s208
          %s210 = sand.u32 %s28, 1
          %s211 = smul.addr %s210, 384
          %s212 = scalar_lea.vmem [#allocation2], %s211
          %s213 = smul.u32 16, %s18
          %s215 = ssub.s32 6144, 6144
          %216 = vsyncadd %s209, %s215
          %s217 = smul.addr %s213, 6
          %s218 = smul.addr %s217, 64
          %s219 = scalar_lea.hbm %s0, %s218
          %s220 = sshll.u32 %s212, 4
          %s221 = int_to_ptr.vmem [resolvable:$true] %s220
          %226 = dma.hbm_to_vmem [thread:$0]  %s219, 6144, %s221, %s209, 384, 384, 24
        $region36: #{tpu_custom_call.1} parent=31 // pred_fallthru
          _
      $region32: #{tpu_custom_call.1} parent=5 // pred_fallthru
        _
      %p227 = scmp.le.s32.totalorder 1, %s18
      %p228 = scmp.lt.s32.totalorder %s18, 3
      %p229 = pnand %p227, %p228
      %p230 = pneg %p229
      // Predicated region
      $region37: #{tpu_custom_call.1} parent=5 // pred_check
        _
      $region38: #{tpu_custom_call.1} parent=5 // pred_check_branch
        %232 = sbr.rel (%p229) target = $region40
      $region39: #{tpu_custom_call.1} parent=5 // pred_region
        %s233 = ssub.s32 %s18, 1
        %s234 = sand.u32 %s31, 1
        %s235 = scalar_lea.sflag [#allocation3], %s234
        %s236 = sand.u32 %s31, 1
        %s237 = smul.addr %s236, 384
        %s238 = scalar_lea.vmem [#allocation2], %s237
        // Predicated region
        $region41: #{tpu_custom_call.1} parent=39 // pred_check
          %p239 = pneg %p44
        $region42: #{tpu_custom_call.1} parent=39 // pred_check_branch
          %241 = sbr.rel (%p239) target = $region44
        $region43: #{tpu_custom_call.1} parent=39 // pred_region
          %242 = dma.done %s235, 6144
        $region44: #{tpu_custom_call.1} parent=39 // pred_fallthru
          _
        // Predicated region
        $region45: #{tpu_custom_call.1} parent=39 // pred_check
          %p243 = pneg %p65
        $region46: #{tpu_custom_call.1} parent=39 // pred_check_branch
          %245 = sbr.rel (%p243) target = $region48
        $region47: #{tpu_custom_call.1} parent=39 // pred_region
          %246 = dma.done [#allocation6], 24576
        $region48: #{tpu_custom_call.1} parent=39 // pred_fallthru
          _
        // Predicated region
        $region49: #{tpu_custom_call.1} parent=39 // pred_check
          %p247 = pneg %p107
        $region50: #{tpu_custom_call.1} parent=39 // pred_check_branch
          %249 = sbr.rel (%p247) target = $region52
        $region51: #{tpu_custom_call.1} parent=39 // pred_region
          %250 = dma.done [#allocation6], 4096
        $region52: #{tpu_custom_call.1} parent=39 // pred_fallthru
          _
        %s251 = sand.u32 %s31, 1
        %s252 = scalar_lea.sflag [#allocation3], %s251
        %s253 = sand.u32 %s31, 1
        %s254 = smul.addr %s253, 384
        %s255 = scalar_lea.vmem [#allocation2], %s254
        %p256 = pneg %p44
        %p257 = pneg %p41
        %p258 = pneg %p65
        %p259 = pneg %p62
        %p260 = pneg %p86
        %p261 = pneg %p83
        %p262 = pneg %p107
        %p263 = pneg %p104
        %p264 = pneg %p128
        %p265 = pneg %p125
        %p266 = pneg %p154
        %p267 = pneg %p151
        %s268 = sand.u32 %s141, 1
        %s269 = scalar_lea.sflag [#allocation4], %s268
        %s270 = sand.u32 %s141, 1
        %s271 = smul.addr %s270, 128
        %s272 = scalar_lea.vmem [#allocation8], %s271
        %s273 = smul.u32 16, %s23
        %s274 = smul.u32 16, %s23
        %v276 = vld [vmem:[%s238] sm:$0xff]
        %v277 = vld [vmem:[%s238 + $0x8] sm:$0xff]
        %v278 = vld [vmem:[%s238 + $0x10] sm:$0xff]
        %v279 = vld [vmem:[%s238 + $0x18] sm:$0xff]
        %v280 = vld [vmem:[%s238 + $0x20] sm:$0xff]
        %v281 = vld [vmem:[%s238 + $0x28] sm:$0xff]
        %v282 = vld [vmem:[%s238 + $0x30] sm:$0xff]
        %v283 = vld [vmem:[%s238 + $0x38] sm:$0xff]
        %v284 = vld [vmem:[%s238 + $0x40] sm:$0xff]
        %v285 = vld [vmem:[%s238 + $0x48] sm:$0xff]
        %v286 = vld [vmem:[%s238 + $0x50] sm:$0xff]
        %v287 = vld [vmem:[%s238 + $0x58] sm:$0xff]
        %v288 = vld [vmem:[%s238 + $0x60] sm:$0xff]
        %v289 = vld [vmem:[%s238 + $0x68] sm:$0xff]
        %v290 = vld [vmem:[%s238 + $0x70] sm:$0xff]
        %v291 = vld [vmem:[%s238 + $0x78] sm:$0xff]
        %v292 = vld [vmem:[%s238 + $0x80] sm:$0xff]
        %v293 = vld [vmem:[%s238 + $0x88] sm:$0xff]
        %v294 = vld [vmem:[%s238 + $0x90] sm:$0xff]
        %v295 = vld [vmem:[%s238 + $0x98] sm:$0xff]
        %v296 = vld [vmem:[%s238 + $0xa0] sm:$0xff]
        %v297 = vld [vmem:[%s238 + $0xa8] sm:$0xff]
        %v298 = vld [vmem:[%s238 + $0xb0] sm:$0xff]
        %v299 = vld [vmem:[%s238 + $0xb8] sm:$0xff]
        %v300 = vld [vmem:[%s238 + $0xc0] sm:$0xff]
        %v301 = vld [vmem:[%s238 + $0xc8] sm:$0xff]
        %v302 = vld [vmem:[%s238 + $0xd0] sm:$0xff]
        %v303 = vld [vmem:[%s238 + $0xd8] sm:$0xff]
        %v304 = vld [vmem:[%s238 + $0xe0] sm:$0xff]
        %v305 = vld [vmem:[%s238 + $0xe8] sm:$0xff]
        %v306 = vld [vmem:[%s238 + $0xf0] sm:$0xff]
        %v307 = vld [vmem:[%s238 + $0xf8] sm:$0xff]
        %v308 = vld [vmem:[%s238 + $0x100] sm:$0xff]
        %v309 = vld [vmem:[%s238 + $0x108] sm:$0xff]
        %v310 = vld [vmem:[%s238 + $0x110] sm:$0xff]
        %v311 = vld [vmem:[%s238 + $0x118] sm:$0xff]
        %v312 = vld [vmem:[%s238 + $0x120] sm:$0xff]
        %v313 = vld [vmem:[%s238 + $0x128] sm:$0xff]
        %v314 = vld [vmem:[%s238 + $0x130] sm:$0xff]
        %v315 = vld [vmem:[%s238 + $0x138] sm:$0xff]
        %v316 = vld [vmem:[%s238 + $0x140] sm:$0xff]
        %v317 = vld [vmem:[%s238 + $0x148] sm:$0xff]
        %v318 = vld [vmem:[%s238 + $0x150] sm:$0xff]
        %v319 = vld [vmem:[%s238 + $0x158] sm:$0xff]
        %v320 = vld [vmem:[%s238 + $0x160] sm:$0xff]
        %v321 = vld [vmem:[%s238 + $0x168] sm:$0xff]
        %v322 = vld [vmem:[%s238 + $0x170] sm:$0xff]
        %v323 = vld [vmem:[%s238 + $0x178] sm:$0xff]
        %v324 = vld [vmem:[#allocation5] sm:$0xff]
        %v325 = vld [vmem:[#allocation5 + $0x8] sm:$0xff]
        %v326 = vld [vmem:[#allocation5 + $0x10] sm:$0xff]
        %v327 = vld [vmem:[#allocation5 + $0x18] sm:$0xff]
        %v328 = vld [vmem:[#allocation5 + $0x20] sm:$0xff]
        %v329 = vld [vmem:[#allocation5 + $0x28] sm:$0xff]
        %v330 = vld [vmem:[#allocation5 + $0x30] sm:$0xff]
        %v331 = vld [vmem:[#allocation5 + $0x38] sm:$0xff]
        %v332 = vld [vmem:[#allocation5 + $0x40] sm:$0xff]
        %v333 = vld [vmem:[#allocation5 + $0x48] sm:$0xff]
        %v334 = vld [vmem:[#allocation5 + $0x50] sm:$0xff]
        %v335 = vld [vmem:[#allocation5 + $0x58] sm:$0xff]
        %v336 = vld [vmem:[#allocation5 + $0x60] sm:$0xff]
        %v337 = vld [vmem:[#allocation5 + $0x68] sm:$0xff]
        %v338 = vld [vmem:[#allocation5 + $0x70] sm:$0xff]
        %v339 = vld [vmem:[#allocation5 + $0x78] sm:$0xff]
        %v340 = vld [vmem:[#allocation5 + $0x80] sm:$0xff]
        %v341 = vld [vmem:[#allocation5 + $0x88] sm:$0xff]
        %v342 = vld [vmem:[#allocation5 + $0x90] sm:$0xff]
        %v343 = vld [vmem:[#allocation5 + $0x98] sm:$0xff]
        %v344 = vld [vmem:[#allocation5 + $0xa0] sm:$0xff]
        %v345 = vld [vmem:[#allocation5 + $0xa8] sm:$0xff]
        %v346 = vld [vmem:[#allocation5 + $0xb0] sm:$0xff]
        %v347 = vld [vmem:[#allocation5 + $0xb8] sm:$0xff]
        %v348 = vld [vmem:[#allocation5 + $0xc0] sm:$0xff]
        %v349 = vld [vmem:[#allocation5 + $0xc8] sm:$0xff]
        %v350 = vld [vmem:[#allocation5 + $0xd0] sm:$0xff]
        %v351 = vld [vmem:[#allocation5 + $0xd8] sm:$0xff]
        %v352 = vld [vmem:[#allocation5 + $0xe0] sm:$0xff]
        %v353 = vld [vmem:[#allocation5 + $0xe8] sm:$0xff]
        %v354 = vld [vmem:[#allocation5 + $0xf0] sm:$0xff]
        %v355 = vld [vmem:[#allocation5 + $0xf8] sm:$0xff]
        %v356 = vld [vmem:[#allocation5 + $0x100] sm:$0xff]
        %v357 = vld [vmem:[#allocation5 + $0x108] sm:$0xff]
        %v358 = vld [vmem:[#allocation5 + $0x110] sm:$0xff]
        %v359 = vld [vmem:[#allocation5 + $0x118] sm:$0xff]
        %v360 = vld [vmem:[#allocation5 + $0x120] sm:$0xff]
        %v361 = vld [vmem:[#allocation5 + $0x128] sm:$0xff]
        %v362 = vld [vmem:[#allocation5 + $0x130] sm:$0xff]
        %v363 = vld [vmem:[#allocation5 + $0x138] sm:$0xff]
        %v364 = vld [vmem:[#allocation5 + $0x140] sm:$0xff]
        %v365 = vld [vmem:[#allocation5 + $0x148] sm:$0xff]
        %v366 = vld [vmem:[#allocation5 + $0x150] sm:$0xff]
        %v367 = vld [vmem:[#allocation5 + $0x158] sm:$0xff]
        %v368 = vld [vmem:[#allocation5 + $0x160] sm:$0xff]
        %v369 = vld [vmem:[#allocation5 + $0x168] sm:$0xff]
        %v370 = vld [vmem:[#allocation5 + $0x170] sm:$0xff]
        %v371 = vld [vmem:[#allocation5 + $0x178] sm:$0xff]
        %v372 = vld [vmem:[#allocation5 + $0x180] sm:$0xff]
        %v373 = vld [vmem:[#allocation5 + $0x188] sm:$0xff]
        %v374 = vld [vmem:[#allocation5 + $0x190] sm:$0xff]
        %v375 = vld [vmem:[#allocation5 + $0x198] sm:$0xff]
        %v376 = vld [vmem:[#allocation5 + $0x1a0] sm:$0xff]
        %v377 = vld [vmem:[#allocation5 + $0x1a8] sm:$0xff]
        %v378 = vld [vmem:[#allocation5 + $0x1b0] sm:$0xff]
        %v379 = vld [vmem:[#allocation5 + $0x1b8] sm:$0xff]
        %v380 = vld [vmem:[#allocation5 + $0x1c0] sm:$0xff]
        %v381 = vld [vmem:[#allocation5 + $0x1c8] sm:$0xff]
        %v382 = vld [vmem:[#allocation5 + $0x1d0] sm:$0xff]
        %v383 = vld [vmem:[#allocation5 + $0x1d8] sm:$0xff]
        %v384 = vld [vmem:[#allocation5 + $0x1e0] sm:$0xff]
        %v385 = vld [vmem:[#allocation5 + $0x1e8] sm:$0xff]
        %v386 = vld [vmem:[#allocation5 + $0x1f0] sm:$0xff]
        %v387 = vld [vmem:[#allocation5 + $0x1f8] sm:$0xff]
        %v388 = vld [vmem:[#allocation5 + $0x200] sm:$0xff]
        %v389 = vld [vmem:[#allocation5 + $0x208] sm:$0xff]
        %v390 = vld [vmem:[#allocation5 + $0x210] sm:$0xff]
        %v391 = vld [vmem:[#allocation5 + $0x218] sm:$0xff]
        %v392 = vld [vmem:[#allocation5 + $0x220] sm:$0xff]
        %v393 = vld [vmem:[#allocation5 + $0x228] sm:$0xff]
        %v394 = vld [vmem:[#allocation5 + $0x230] sm:$0xff]
        %v395 = vld [vmem:[#allocation5 + $0x238] sm:$0xff]
        %v396 = vld [vmem:[#allocation5 + $0x240] sm:$0xff]
        %v397 = vld [vmem:[#allocation5 + $0x248] sm:$0xff]
        %v398 = vld [vmem:[#allocation5 + $0x250] sm:$0xff]
        %v399 = vld [vmem:[#allocation5 + $0x258] sm:$0xff]
        %v400 = vld [vmem:[#allocation5 + $0x260] sm:$0xff]
        %v401 = vld [vmem:[#allocation5 + $0x268] sm:$0xff]
        %v402 = vld [vmem:[#allocation5 + $0x270] sm:$0xff]
        %v403 = vld [vmem:[#allocation5 + $0x278] sm:$0xff]
        %v404 = vld [vmem:[#allocation5 + $0x280] sm:$0xff]
        %v405 = vld [vmem:[#allocation5 + $0x288] sm:$0xff]
        %v406 = vld [vmem:[#allocation5 + $0x290] sm:$0xff]
        %v407 = vld [vmem:[#allocation5 + $0x298] sm:$0xff]
        %v408 = vld [vmem:[#allocation5 + $0x2a0] sm:$0xff]
        %v409 = vld [vmem:[#allocation5 + $0x2a8] sm:$0xff]
        %v410 = vld [vmem:[#allocation5 + $0x2b0] sm:$0xff]
        %v411 = vld [vmem:[#allocation5 + $0x2b8] sm:$0xff]
        %v412 = vld [vmem:[#allocation5 + $0x2c0] sm:$0xff]
        %v413 = vld [vmem:[#allocation5 + $0x2c8] sm:$0xff]
        %v414 = vld [vmem:[#allocation5 + $0x2d0] sm:$0xff]
        %v415 = vld [vmem:[#allocation5 + $0x2d8] sm:$0xff]
        %v416 = vld [vmem:[#allocation5 + $0x2e0] sm:$0xff]
        %v417 = vld [vmem:[#allocation5 + $0x2e8] sm:$0xff]
        %v418 = vld [vmem:[#allocation5 + $0x2f0] sm:$0xff]
        %v419 = vld [vmem:[#allocation5 + $0x2f8] sm:$0xff]
        %v420 = vld [vmem:[#allocation5 + $0x300] sm:$0xff]
        %v421 = vld [vmem:[#allocation5 + $0x308] sm:$0xff]
        %v422 = vld [vmem:[#allocation5 + $0x310] sm:$0xff]
        %v423 = vld [vmem:[#allocation5 + $0x318] sm:$0xff]
        %v424 = vld [vmem:[#allocation5 + $0x320] sm:$0xff]
        %v425 = vld [vmem:[#allocation5 + $0x328] sm:$0xff]
        %v426 = vld [vmem:[#allocation5 + $0x330] sm:$0xff]
        %v427 = vld [vmem:[#allocation5 + $0x338] sm:$0xff]
        %v428 = vld [vmem:[#allocation5 + $0x340] sm:$0xff]
        %v429 = vld [vmem:[#allocation5 + $0x348] sm:$0xff]
        %v430 = vld [vmem:[#allocation5 + $0x350] sm:$0xff]
        %v431 = vld [vmem:[#allocation5 + $0x358] sm:$0xff]
        %v432 = vld [vmem:[#allocation5 + $0x360] sm:$0xff]
        %v433 = vld [vmem:[#allocation5 + $0x368] sm:$0xff]
        %v434 = vld [vmem:[#allocation5 + $0x370] sm:$0xff]
        %v435 = vld [vmem:[#allocation5 + $0x378] sm:$0xff]
        %v436 = vld [vmem:[#allocation5 + $0x380] sm:$0xff]
        %v437 = vld [vmem:[#allocation5 + $0x388] sm:$0xff]
        %v438 = vld [vmem:[#allocation5 + $0x390] sm:$0xff]
        %v439 = vld [vmem:[#allocation5 + $0x398] sm:$0xff]
        %v440 = vld [vmem:[#allocation5 + $0x3a0] sm:$0xff]
        %v441 = vld [vmem:[#allocation5 + $0x3a8] sm:$0xff]
        %v442 = vld [vmem:[#allocation5 + $0x3b0] sm:$0xff]
        %v443 = vld [vmem:[#allocation5 + $0x3b8] sm:$0xff]
        %v444 = vld [vmem:[#allocation5 + $0x3c0] sm:$0xff]
        %v445 = vld [vmem:[#allocation5 + $0x3c8] sm:$0xff]
        %v446 = vld [vmem:[#allocation5 + $0x3d0] sm:$0xff]
        %v447 = vld [vmem:[#allocation5 + $0x3d8] sm:$0xff]
        %v448 = vld [vmem:[#allocation5 + $0x3e0] sm:$0xff]
        %v449 = vld [vmem:[#allocation5 + $0x3e8] sm:$0xff]
        %v450 = vld [vmem:[#allocation5 + $0x3f0] sm:$0xff]
        %v451 = vld [vmem:[#allocation5 + $0x3f8] sm:$0xff]
        %v452 = vld [vmem:[#allocation5 + $0x400] sm:$0xff]
        %v453 = vld [vmem:[#allocation5 + $0x408] sm:$0xff]
        %v454 = vld [vmem:[#allocation5 + $0x410] sm:$0xff]
        %v455 = vld [vmem:[#allocation5 + $0x418] sm:$0xff]
        %v456 = vld [vmem:[#allocation5 + $0x420] sm:$0xff]
        %v457 = vld [vmem:[#allocation5 + $0x428] sm:$0xff]
        %v458 = vld [vmem:[#allocation5 + $0x430] sm:$0xff]
        %v459 = vld [vmem:[#allocation5 + $0x438] sm:$0xff]
        %v460 = vld [vmem:[#allocation5 + $0x440] sm:$0xff]
        %v461 = vld [vmem:[#allocation5 + $0x448] sm:$0xff]
        %v462 = vld [vmem:[#allocation5 + $0x450] sm:$0xff]
        %v463 = vld [vmem:[#allocation5 + $0x458] sm:$0xff]
        %v464 = vld [vmem:[#allocation5 + $0x460] sm:$0xff]
        %v465 = vld [vmem:[#allocation5 + $0x468] sm:$0xff]
        %v466 = vld [vmem:[#allocation5 + $0x470] sm:$0xff]
        %v467 = vld [vmem:[#allocation5 + $0x478] sm:$0xff]
        %v468 = vld [vmem:[#allocation5 + $0x480] sm:$0xff]
        %v469 = vld [vmem:[#allocation5 + $0x488] sm:$0xff]
        %v470 = vld [vmem:[#allocation5 + $0x490] sm:$0xff]
        %v471 = vld [vmem:[#allocation5 + $0x498] sm:$0xff]
        %v472 = vld [vmem:[#allocation5 + $0x4a0] sm:$0xff]
        %v473 = vld [vmem:[#allocation5 + $0x4a8] sm:$0xff]
        %v474 = vld [vmem:[#allocation5 + $0x4b0] sm:$0xff]
        %v475 = vld [vmem:[#allocation5 + $0x4b8] sm:$0xff]
        %v476 = vld [vmem:[#allocation5 + $0x4c0] sm:$0xff]
        %v477 = vld [vmem:[#allocation5 + $0x4c8] sm:$0xff]
        %v478 = vld [vmem:[#allocation5 + $0x4d0] sm:$0xff]
        %v479 = vld [vmem:[#allocation5 + $0x4d8] sm:$0xff]
        %v480 = vld [vmem:[#allocation5 + $0x4e0] sm:$0xff]
        %v481 = vld [vmem:[#allocation5 + $0x4e8] sm:$0xff]
        %v482 = vld [vmem:[#allocation5 + $0x4f0] sm:$0xff]
        %v483 = vld [vmem:[#allocation5 + $0x4f8] sm:$0xff]
        %v484 = vld [vmem:[#allocation5 + $0x500] sm:$0xff]
        %v485 = vld [vmem:[#allocation5 + $0x508] sm:$0xff]
        %v486 = vld [vmem:[#allocation5 + $0x510] sm:$0xff]
        %v487 = vld [vmem:[#allocation5 + $0x518] sm:$0xff]
        %v488 = vld [vmem:[#allocation5 + $0x520] sm:$0xff]
        %v489 = vld [vmem:[#allocation5 + $0x528] sm:$0xff]
        %v490 = vld [vmem:[#allocation5 + $0x530] sm:$0xff]
        %v491 = vld [vmem:[#allocation5 + $0x538] sm:$0xff]
        %v492 = vld [vmem:[#allocation5 + $0x540] sm:$0xff]
        %v493 = vld [vmem:[#allocation5 + $0x548] sm:$0xff]
        %v494 = vld [vmem:[#allocation5 + $0x550] sm:$0xff]
        %v495 = vld [vmem:[#allocation5 + $0x558] sm:$0xff]
        %v496 = vld [vmem:[#allocation5 + $0x560] sm:$0xff]
        %v497 = vld [vmem:[#allocation5 + $0x568] sm:$0xff]
        %v498 = vld [vmem:[#allocation5 + $0x570] sm:$0xff]
        %v499 = vld [vmem:[#allocation5 + $0x578] sm:$0xff]
        %v500 = vld [vmem:[#allocation5 + $0x580] sm:$0xff]
        %v501 = vld [vmem:[#allocation5 + $0x588] sm:$0xff]
        %v502 = vld [vmem:[#allocation5 + $0x590] sm:$0xff]
        %v503 = vld [vmem:[#allocation5 + $0x598] sm:$0xff]
        %v504 = vld [vmem:[#allocation5 + $0x5a0] sm:$0xff]
        %v505 = vld [vmem:[#allocation5 + $0x5a8] sm:$0xff]
        %v506 = vld [vmem:[#allocation5 + $0x5b0] sm:$0xff]
        %v507 = vld [vmem:[#allocation5 + $0x5b8] sm:$0xff]
        %v508 = vld [vmem:[#allocation5 + $0x5c0] sm:$0xff]
        %v509 = vld [vmem:[#allocation5 + $0x5c8] sm:$0xff]
        %v510 = vld [vmem:[#allocation5 + $0x5d0] sm:$0xff]
        %v511 = vld [vmem:[#allocation5 + $0x5d8] sm:$0xff]
        %v512 = vld [vmem:[#allocation5 + $0x5e0] sm:$0xff]
        %v513 = vld [vmem:[#allocation5 + $0x5e8] sm:$0xff]
        %v514 = vld [vmem:[#allocation5 + $0x5f0] sm:$0xff]
        %v515 = vld [vmem:[#allocation5 + $0x5f8] sm:$0xff]
        %v516 = vld [vmem:[%s2] sm:$0xf]
        %v518 = vlaneseq
        %v519 = vshrl.u32 %v518, 7
        %v520 = vsub.s32 0, %v519
        %v521 = vrot.slane %v516, %v520
        %v522 = vlaneseq
        %v523 = vshrl.u32 %v522, 7
        %v524 = vsub.s32 1, %v523
        %v525 = vrot.slane %v516, %v524
        %v526 = vlaneseq
        %v527 = vshrl.u32 %v526, 7
        %v528 = vsub.s32 2, %v527
        %v529 = vrot.slane %v516, %v528
        %v530 = vlaneseq
        %v531 = vshrl.u32 %v530, 7
        %v532 = vsub.s32 3, %v531
        %v533 = vrot.slane %v516, %v532
        %v586 = vunpack.c.l.b16 %v276
        %v587 = vunpack.c.h.b16 %v276
        %v588 = vunpack.c.l.b16 %v277
        %v589 = vunpack.c.h.b16 %v277
        %v590 = vunpack.c.l.b16 %v278
        %v591 = vunpack.c.h.b16 %v278
        %v592 = vunpack.c.l.b16 %v279
        %v593 = vunpack.c.h.b16 %v279
        %v594 = vunpack.c.l.b16 %v280
        %v595 = vunpack.c.h.b16 %v280
        %v596 = vunpack.c.l.b16 %v281
        %v597 = vunpack.c.h.b16 %v281
        %v598 = vunpack.c.l.b16 %v282
        %v599 = vunpack.c.h.b16 %v282
        %v600 = vunpack.c.l.b16 %v283
        %v601 = vunpack.c.h.b16 %v283
        %v602 = vunpack.c.l.b16 %v284
        %v603 = vunpack.c.h.b16 %v284
        %v604 = vunpack.c.l.b16 %v285
        %v605 = vunpack.c.h.b16 %v285
        %v606 = vunpack.c.l.b16 %v286
        %v607 = vunpack.c.h.b16 %v286
        %v608 = vunpack.c.l.b16 %v287
        %v609 = vunpack.c.h.b16 %v287
        %v610 = vunpack.c.l.b16 %v288
        %v611 = vunpack.c.h.b16 %v288
        %v612 = vunpack.c.l.b16 %v289
        %v613 = vunpack.c.h.b16 %v289
        %v614 = vunpack.c.l.b16 %v290
        %v615 = vunpack.c.h.b16 %v290
        %v616 = vunpack.c.l.b16 %v291
        %v617 = vunpack.c.h.b16 %v291
        %v618 = vunpack.c.l.b16 %v292
        %v619 = vunpack.c.h.b16 %v292
        %v620 = vunpack.c.l.b16 %v293
        %v621 = vunpack.c.h.b16 %v293
        %v622 = vunpack.c.l.b16 %v294
        %v623 = vunpack.c.h.b16 %v294
        %v624 = vunpack.c.l.b16 %v295
        %v625 = vunpack.c.h.b16 %v295
        %v626 = vunpack.c.l.b16 %v296
        %v627 = vunpack.c.h.b16 %v296
        %v628 = vunpack.c.l.b16 %v297
        %v629 = vunpack.c.h.b16 %v297
        %v630 = vunpack.c.l.b16 %v298
        %v631 = vunpack.c.h.b16 %v298
        %v632 = vunpack.c.l.b16 %v299
        %v633 = vunpack.c.h.b16 %v299
        %v634 = vunpack.c.l.b16 %v300
        %v635 = vunpack.c.h.b16 %v300
        %v636 = vunpack.c.l.b16 %v301
        %v637 = vunpack.c.h.b16 %v301
        %v638 = vunpack.c.l.b16 %v302
        %v639 = vunpack.c.h.b16 %v302
        %v640 = vunpack.c.l.b16 %v303
        %v641 = vunpack.c.h.b16 %v303
        %v642 = vunpack.c.l.b16 %v304
        %v643 = vunpack.c.h.b16 %v304
        %v644 = vunpack.c.l.b16 %v305
        %v645 = vunpack.c.h.b16 %v305
        %v646 = vunpack.c.l.b16 %v306
        %v647 = vunpack.c.h.b16 %v306
        %v648 = vunpack.c.l.b16 %v307
        %v649 = vunpack.c.h.b16 %v307
        %v650 = vunpack.c.l.b16 %v308
        %v651 = vunpack.c.h.b16 %v308
        %v652 = vunpack.c.l.b16 %v309
        %v653 = vunpack.c.h.b16 %v309
        %v654 = vunpack.c.l.b16 %v310
        %v655 = vunpack.c.h.b16 %v310
        %v656 = vunpack.c.l.b16 %v311
        %v657 = vunpack.c.h.b16 %v311
        %v658 = vunpack.c.l.b16 %v312
        %v659 = vunpack.c.h.b16 %v312
        %v660 = vunpack.c.l.b16 %v313
        %v661 = vunpack.c.h.b16 %v313
        %v662 = vunpack.c.l.b16 %v314
        %v663 = vunpack.c.h.b16 %v314
        %v664 = vunpack.c.l.b16 %v315
        %v665 = vunpack.c.h.b16 %v315
        %v666 = vunpack.c.l.b16 %v316
        %v667 = vunpack.c.h.b16 %v316
        %v668 = vunpack.c.l.b16 %v317
        %v669 = vunpack.c.h.b16 %v317
        %v670 = vunpack.c.l.b16 %v318
        %v671 = vunpack.c.h.b16 %v318
        %v672 = vunpack.c.l.b16 %v319
        %v673 = vunpack.c.h.b16 %v319
        %v674 = vunpack.c.l.b16 %v320
        %v675 = vunpack.c.h.b16 %v320
        %v676 = vunpack.c.l.b16 %v321
        %v677 = vunpack.c.h.b16 %v321
        %v678 = vunpack.c.l.b16 %v322
        %v679 = vunpack.c.h.b16 %v322
        %v680 = vunpack.c.l.b16 %v323
        %v681 = vunpack.c.h.b16 %v323
        %v682 = vpack.c.b16 %v592, %v586
        %v683 = vpack.c.b16 %v593, %v587
        %v684 = vpack.c.b16 %v594, %v588
        %v685 = vpack.c.b16 %v595, %v589
        %v686 = vpack.c.b16 %v596, %v590
        %v687 = vpack.c.b16 %v597, %v591
        %v688 = vpack.c.b16 %v604, %v598
        %v689 = vpack.c.b16 %v605, %v599
        %v690 = vpack.c.b16 %v606, %v600
        %v691 = vpack.c.b16 %v607, %v601
        %v692 = vpack.c.b16 %v608, %v602
        %v693 = vpack.c.b16 %v609, %v603
        %v694 = vpack.c.b16 %v616, %v610
        %v695 = vpack.c.b16 %v617, %v611
        %v696 = vpack.c.b16 %v618, %v612
        %v697 = vpack.c.b16 %v619, %v613
        %v698 = vpack.c.b16 %v620, %v614
        %v699 = vpack.c.b16 %v621, %v615
        %v700 = vpack.c.b16 %v628, %v622
        %v701 = vpack.c.b16 %v629, %v623
        %v702 = vpack.c.b16 %v630, %v624
        %v703 = vpack.c.b16 %v631, %v625
        %v704 = vpack.c.b16 %v632, %v626
        %v705 = vpack.c.b16 %v633, %v627
        %v706 = vpack.c.b16 %v640, %v634
        %v707 = vpack.c.b16 %v641, %v635
        %v708 = vpack.c.b16 %v642, %v636
        %v709 = vpack.c.b16 %v643, %v637
        %v710 = vpack.c.b16 %v644, %v638
        %v711 = vpack.c.b16 %v645, %v639
        %v712 = vpack.c.b16 %v652, %v646
        %v713 = vpack.c.b16 %v653, %v647
        %v714 = vpack.c.b16 %v654, %v648
        %v715 = vpack.c.b16 %v655, %v649
        %v716 = vpack.c.b16 %v656, %v650
        %v717 = vpack.c.b16 %v657, %v651
        %v718 = vpack.c.b16 %v664, %v658
        %v719 = vpack.c.b16 %v665, %v659
        %v720 = vpack.c.b16 %v666, %v660
        %v721 = vpack.c.b16 %v667, %v661
        %v722 = vpack.c.b16 %v668, %v662
        %v723 = vpack.c.b16 %v669, %v663
        %v724 = vpack.c.b16 %v676, %v670
        %v725 = vpack.c.b16 %v677, %v671
        %v726 = vpack.c.b16 %v678, %v672
        %v727 = vpack.c.b16 %v679, %v673
        %v728 = vpack.c.b16 %v680, %v674
        %v729 = vpack.c.b16 %v681, %v675
        %v970 = vunpack.c.l.b16 %v324
        %v971 = vunpack.c.h.b16 %v324
        %v972 = vunpack.c.l.b16 %v325
        %v973 = vunpack.c.h.b16 %v325
        %v974 = vunpack.c.l.b16 %v326
        %v975 = vunpack.c.h.b16 %v326
        %v976 = vunpack.c.l.b16 %v327
        %v977 = vunpack.c.h.b16 %v327
        %v978 = vunpack.c.l.b16 %v328
        %v979 = vunpack.c.h.b16 %v328
        %v980 = vunpack.c.l.b16 %v329
        %v981 = vunpack.c.h.b16 %v329
        %v982 = vunpack.c.l.b16 %v330
        %v983 = vunpack.c.h.b16 %v330
        %v984 = vunpack.c.l.b16 %v331
        %v985 = vunpack.c.h.b16 %v331
        %v986 = vunpack.c.l.b16 %v332
        %v987 = vunpack.c.h.b16 %v332
        %v988 = vunpack.c.l.b16 %v333
        %v989 = vunpack.c.h.b16 %v333
        %v990 = vunpack.c.l.b16 %v334
        %v991 = vunpack.c.h.b16 %v334
        %v992 = vunpack.c.l.b16 %v335
        %v993 = vunpack.c.h.b16 %v335
        %v994 = vunpack.c.l.b16 %v336
        %v995 = vunpack.c.h.b16 %v336
        %v996 = vunpack.c.l.b16 %v337
        %v997 = vunpack.c.h.b16 %v337
        %v998 = vunpack.c.l.b16 %v338
        %v999 = vunpack.c.h.b16 %v338
        %v1000 = vunpack.c.l.b16 %v339
        %v1001 = vunpack.c.h.b16 %v339
        %v1002 = vunpack.c.l.b16 %v340
        %v1003 = vunpack.c.h.b16 %v340
        %v1004 = vunpack.c.l.b16 %v341
        %v1005 = vunpack.c.h.b16 %v341
        %v1006 = vunpack.c.l.b16 %v342
        %v1007 = vunpack.c.h.b16 %v342
        %v1008 = vunpack.c.l.b16 %v343
        %v1009 = vunpack.c.h.b16 %v343
        %v1010 = vunpack.c.l.b16 %v344
        %v1011 = vunpack.c.h.b16 %v344
        %v1012 = vunpack.c.l.b16 %v345
        %v1013 = vunpack.c.h.b16 %v345
        %v1014 = vunpack.c.l.b16 %v346
        %v1015 = vunpack.c.h.b16 %v346
        %v1016 = vunpack.c.l.b16 %v347
        %v1017 = vunpack.c.h.b16 %v347
        %v1018 = vunpack.c.l.b16 %v348
        %v1019 = vunpack.c.h.b16 %v348
        %v1020 = vunpack.c.l.b16 %v349
        %v1021 = vunpack.c.h.b16 %v349
        %v1022 = vunpack.c.l.b16 %v350
        %v1023 = vunpack.c.h.b16 %v350
        %v1024 = vunpack.c.l.b16 %v351
        %v1025 = vunpack.c.h.b16 %v351
        %v1026 = vunpack.c.l.b16 %v352
        %v1027 = vunpack.c.h.b16 %v352
        %v1028 = vunpack.c.l.b16 %v353
        %v1029 = vunpack.c.h.b16 %v353
        %v1030 = vunpack.c.l.b16 %v354
        %v1031 = vunpack.c.h.b16 %v354
        %v1032 = vunpack.c.l.b16 %v355
        %v1033 = vunpack.c.h.b16 %v355
        %v1034 = vunpack.c.l.b16 %v356
        %v1035 = vunpack.c.h.b16 %v356
        %v1036 = vunpack.c.l.b16 %v357
        %v1037 = vunpack.c.h.b16 %v357
        %v1038 = vunpack.c.l.b16 %v358
        %v1039 = vunpack.c.h.b16 %v358
        %v1040 = vunpack.c.l.b16 %v359
        %v1041 = vunpack.c.h.b16 %v359
        %v1042 = vunpack.c.l.b16 %v360
        %v1043 = vunpack.c.h.b16 %v360
        %v1044 = vunpack.c.l.b16 %v361
        %v1045 = vunpack.c.h.b16 %v361
        %v1046 = vunpack.c.l.b16 %v362
        %v1047 = vunpack.c.h.b16 %v362
        %v1048 = vunpack.c.l.b16 %v363
        %v1049 = vunpack.c.h.b16 %v363
        %v1050 = vunpack.c.l.b16 %v364
        %v1051 = vunpack.c.h.b16 %v364
        %v1052 = vunpack.c.l.b16 %v365
        %v1053 = vunpack.c.h.b16 %v365
        %v1054 = vunpack.c.l.b16 %v366
        %v1055 = vunpack.c.h.b16 %v366
        %v1056 = vunpack.c.l.b16 %v367
        %v1057 = vunpack.c.h.b16 %v367
        %v1058 = vunpack.c.l.b16 %v368
        %v1059 = vunpack.c.h.b16 %v368
        %v1060 = vunpack.c.l.b16 %v369
        %v1061 = vunpack.c.h.b16 %v369
        %v1062 = vunpack.c.l.b16 %v370
        %v1063 = vunpack.c.h.b16 %v370
        %v1064 = vunpack.c.l.b16 %v371
        %v1065 = vunpack.c.h.b16 %v371
        %v1066 = vunpack.c.l.b16 %v372
        %v1067 = vunpack.c.h.b16 %v372
        %v1068 = vunpack.c.l.b16 %v373
        %v1069 = vunpack.c.h.b16 %v373
        %v1070 = vunpack.c.l.b16 %v374
        %v1071 = vunpack.c.h.b16 %v374
        %v1072 = vunpack.c.l.b16 %v375
        %v1073 = vunpack.c.h.b16 %v375
        %v1074 = vunpack.c.l.b16 %v376
        %v1075 = vunpack.c.h.b16 %v376
        %v1076 = vunpack.c.l.b16 %v377
        %v1077 = vunpack.c.h.b16 %v377
        %v1078 = vunpack.c.l.b16 %v378
        %v1079 = vunpack.c.h.b16 %v378
        %v1080 = vunpack.c.l.b16 %v379
        %v1081 = vunpack.c.h.b16 %v379
        %v1082 = vunpack.c.l.b16 %v380
        %v1083 = vunpack.c.h.b16 %v380
        %v1084 = vunpack.c.l.b16 %v381
        %v1085 = vunpack.c.h.b16 %v381
        %v1086 = vunpack.c.l.b16 %v382
        %v1087 = vunpack.c.h.b16 %v382
        %v1088 = vunpack.c.l.b16 %v383
        %v1089 = vunpack.c.h.b16 %v383
        %v1090 = vunpack.c.l.b16 %v384
        %v1091 = vunpack.c.h.b16 %v384
        %v1092 = vunpack.c.l.b16 %v385
        %v1093 = vunpack.c.h.b16 %v385
        %v1094 = vunpack.c.l.b16 %v386
        %v1095 = vunpack.c.h.b16 %v386
        %v1096 = vunpack.c.l.b16 %v387
        %v1097 = vunpack.c.h.b16 %v387
        %v1098 = vunpack.c.l.b16 %v388
        %v1099 = vunpack.c.h.b16 %v388
        %v1100 = vunpack.c.l.b16 %v389
        %v1101 = vunpack.c.h.b16 %v389
        %v1102 = vunpack.c.l.b16 %v390
        %v1103 = vunpack.c.h.b16 %v390
        %v1104 = vunpack.c.l.b16 %v391
        %v1105 = vunpack.c.h.b16 %v391
        %v1106 = vunpack.c.l.b16 %v392
        %v1107 = vunpack.c.h.b16 %v392
        %v1108 = vunpack.c.l.b16 %v393
        %v1109 = vunpack.c.h.b16 %v393
        %v1110 = vunpack.c.l.b16 %v394
        %v1111 = vunpack.c.h.b16 %v394
        %v1112 = vunpack.c.l.b16 %v395
        %v1113 = vunpack.c.h.b16 %v395
        %v1114 = vunpack.c.l.b16 %v396
        %v1115 = vunpack.c.h.b16 %v396
        %v1116 = vunpack.c.l.b16 %v397
        %v1117 = vunpack.c.h.b16 %v397
        %v1118 = vunpack.c.l.b16 %v398
        %v1119 = vunpack.c.h.b16 %v398
        %v1120 = vunpack.c.l.b16 %v399
        %v1121 = vunpack.c.h.b16 %v399
        %v1122 = vunpack.c.l.b16 %v400
        %v1123 = vunpack.c.h.b16 %v400
        %v1124 = vunpack.c.l.b16 %v401
        %v1125 = vunpack.c.h.b16 %v401
        %v1126 = vunpack.c.l.b16 %v402
        %v1127 = vunpack.c.h.b16 %v402
        %v1128 = vunpack.c.l.b16 %v403
        %v1129 = vunpack.c.h.b16 %v403
        %v1130 = vunpack.c.l.b16 %v404
        %v1131 = vunpack.c.h.b16 %v404
        %v1132 = vunpack.c.l.b16 %v405
        %v1133 = vunpack.c.h.b16 %v405
        %v1134 = vunpack.c.l.b16 %v406
        %v1135 = vunpack.c.h.b16 %v406
        %v1136 = vunpack.c.l.b16 %v407
        %v1137 = vunpack.c.h.b16 %v407
        %v1138 = vunpack.c.l.b16 %v408
        %v1139 = vunpack.c.h.b16 %v408
        %v1140 = vunpack.c.l.b16 %v409
        %v1141 = vunpack.c.h.b16 %v409
        %v1142 = vunpack.c.l.b16 %v410
        %v1143 = vunpack.c.h.b16 %v410
        %v1144 = vunpack.c.l.b16 %v411
        %v1145 = vunpack.c.h.b16 %v411
        %v1146 = vunpack.c.l.b16 %v412
        %v1147 = vunpack.c.h.b16 %v412
        %v1148 = vunpack.c.l.b16 %v413
        %v1149 = vunpack.c.h.b16 %v413
        %v1150 = vunpack.c.l.b16 %v414
        %v1151 = vunpack.c.h.b16 %v414
        %v1152 = vunpack.c.l.b16 %v415
        %v1153 = vunpack.c.h.b16 %v415
        %v1154 = vunpack.c.l.b16 %v416
        %v1155 = vunpack.c.h.b16 %v416
        %v1156 = vunpack.c.l.b16 %v417
        %v1157 = vunpack.c.h.b16 %v417
        %v1158 = vunpack.c.l.b16 %v418
        %v1159 = vunpack.c.h.b16 %v418
        %v1160 = vunpack.c.l.b16 %v419
        %v1161 = vunpack.c.h.b16 %v419
        %v1162 = vunpack.c.l.b16 %v420
        %v1163 = vunpack.c.h.b16 %v420
        %v1164 = vunpack.c.l.b16 %v421
        %v1165 = vunpack.c.h.b16 %v421
        %v1166 = vunpack.c.l.b16 %v422
        %v1167 = vunpack.c.h.b16 %v422
        %v1168 = vunpack.c.l.b16 %v423
        %v1169 = vunpack.c.h.b16 %v423
        %v1170 = vunpack.c.l.b16 %v424
        %v1171 = vunpack.c.h.b16 %v424
        %v1172 = vunpack.c.l.b16 %v425
        %v1173 = vunpack.c.h.b16 %v425
        %v1174 = vunpack.c.l.b16 %v426
        %v1175 = vunpack.c.h.b16 %v426
        %v1176 = vunpack.c.l.b16 %v427
        %v1177 = vunpack.c.h.b16 %v427
        %v1178 = vunpack.c.l.b16 %v428
        %v1179 = vunpack.c.h.b16 %v428
        %v1180 = vunpack.c.l.b16 %v429
        %v1181 = vunpack.c.h.b16 %v429
        %v1182 = vunpack.c.l.b16 %v430
        %v1183 = vunpack.c.h.b16 %v430
        %v1184 = vunpack.c.l.b16 %v431
        %v1185 = vunpack.c.h.b16 %v431
        %v1186 = vunpack.c.l.b16 %v432
        %v1187 = vunpack.c.h.b16 %v432
        %v1188 = vunpack.c.l.b16 %v433
        %v1189 = vunpack.c.h.b16 %v433
        %v1190 = vunpack.c.l.b16 %v434
        %v1191 = vunpack.c.h.b16 %v434
        %v1192 = vunpack.c.l.b16 %v435
        %v1193 = vunpack.c.h.b16 %v435
        %v1194 = vunpack.c.l.b16 %v436
        %v1195 = vunpack.c.h.b16 %v436
        %v1196 = vunpack.c.l.b16 %v437
        %v1197 = vunpack.c.h.b16 %v437
        %v1198 = vunpack.c.l.b16 %v438
        %v1199 = vunpack.c.h.b16 %v438
        %v1200 = vunpack.c.l.b16 %v439
        %v1201 = vunpack.c.h.b16 %v439
        %v1202 = vunpack.c.l.b16 %v440
        %v1203 = vunpack.c.h.b16 %v440
        %v1204 = vunpack.c.l.b16 %v441
        %v1205 = vunpack.c.h.b16 %v441
        %v1206 = vunpack.c.l.b16 %v442
        %v1207 = vunpack.c.h.b16 %v442
        %v1208 = vunpack.c.l.b16 %v443
        %v1209 = vunpack.c.h.b16 %v443
        %v1210 = vunpack.c.l.b16 %v444
        %v1211 = vunpack.c.h.b16 %v444
        %v1212 = vunpack.c.l.b16 %v445
        %v1213 = vunpack.c.h.b16 %v445
        %v1214 = vunpack.c.l.b16 %v446
        %v1215 = vunpack.c.h.b16 %v446
        %v1216 = vunpack.c.l.b16 %v447
        %v1217 = vunpack.c.h.b16 %v447
        %v1218 = vunpack.c.l.b16 %v448
        %v1219 = vunpack.c.h.b16 %v448
        %v1220 = vunpack.c.l.b16 %v449
        %v1221 = vunpack.c.h.b16 %v449
        %v1222 = vunpack.c.l.b16 %v450
        %v1223 = vunpack.c.h.b16 %v450
        %v1224 = vunpack.c.l.b16 %v451
        %v1225 = vunpack.c.h.b16 %v451
        %v1226 = vunpack.c.l.b16 %v452
        %v1227 = vunpack.c.h.b16 %v452
        %v1228 = vunpack.c.l.b16 %v453
        %v1229 = vunpack.c.h.b16 %v453
        %v1230 = vunpack.c.l.b16 %v454
        %v1231 = vunpack.c.h.b16 %v454
        %v1232 = vunpack.c.l.b16 %v455
        %v1233 = vunpack.c.h.b16 %v455
        %v1234 = vunpack.c.l.b16 %v456
        %v1235 = vunpack.c.h.b16 %v456
        %v1236 = vunpack.c.l.b16 %v457
        %v1237 = vunpack.c.h.b16 %v457
        %v1238 = vunpack.c.l.b16 %v458
        %v1239 = vunpack.c.h.b16 %v458
        %v1240 = vunpack.c.l.b16 %v459
        %v1241 = vunpack.c.h.b16 %v459
        %v1242 = vunpack.c.l.b16 %v460
        %v1243 = vunpack.c.h.b16 %v460
        %v1244 = vunpack.c.l.b16 %v461
        %v1245 = vunpack.c.h.b16 %v461
        %v1246 = vunpack.c.l.b16 %v462
        %v1247 = vunpack.c.h.b16 %v462
        %v1248 = vunpack.c.l.b16 %v463
        %v1249 = vunpack.c.h.b16 %v463
        %v1250 = vunpack.c.l.b16 %v464
        %v1251 = vunpack.c.h.b16 %v464
        %v1252 = vunpack.c.l.b16 %v465
        %v1253 = vunpack.c.h.b16 %v465
        %v1254 = vunpack.c.l.b16 %v466
        %v1255 = vunpack.c.h.b16 %v466
        %v1256 = vunpack.c.l.b16 %v467
        %v1257 = vunpack.c.h.b16 %v467
        %v1258 = vunpack.c.l.b16 %v468
        %v1259 = vunpack.c.h.b16 %v468
        %v1260 = vunpack.c.l.b16 %v469
        %v1261 = vunpack.c.h.b16 %v469
        %v1262 = vunpack.c.l.b16 %v470
        %v1263 = vunpack.c.h.b16 %v470
        %v1264 = vunpack.c.l.b16 %v471
        %v1265 = vunpack.c.h.b16 %v471
        %v1266 = vunpack.c.l.b16 %v472
        %v1267 = vunpack.c.h.b16 %v472
        %v1268 = vunpack.c.l.b16 %v473
        %v1269 = vunpack.c.h.b16 %v473
        %v1270 = vunpack.c.l.b16 %v474
        %v1271 = vunpack.c.h.b16 %v474
        %v1272 = vunpack.c.l.b16 %v475
        %v1273 = vunpack.c.h.b16 %v475
        %v1274 = vunpack.c.l.b16 %v476
        %v1275 = vunpack.c.h.b16 %v476
        %v1276 = vunpack.c.l.b16 %v477
        %v1277 = vunpack.c.h.b16 %v477
        %v1278 = vunpack.c.l.b16 %v478
        %v1279 = vunpack.c.h.b16 %v478
        %v1280 = vunpack.c.l.b16 %v479
        %v1281 = vunpack.c.h.b16 %v479
        %v1282 = vunpack.c.l.b16 %v480
        %v1283 = vunpack.c.h.b16 %v480
        %v1284 = vunpack.c.l.b16 %v481
        %v1285 = vunpack.c.h.b16 %v481
        %v1286 = vunpack.c.l.b16 %v482
        %v1287 = vunpack.c.h.b16 %v482
        %v1288 = vunpack.c.l.b16 %v483
        %v1289 = vunpack.c.h.b16 %v483
        %v1290 = vunpack.c.l.b16 %v484
        %v1291 = vunpack.c.h.b16 %v484
        %v1292 = vunpack.c.l.b16 %v485
        %v1293 = vunpack.c.h.b16 %v485
        %v1294 = vunpack.c.l.b16 %v486
        %v1295 = vunpack.c.h.b16 %v486
        %v1296 = vunpack.c.l.b16 %v487
        %v1297 = vunpack.c.h.b16 %v487
        %v1298 = vunpack.c.l.b16 %v488
        %v1299 = vunpack.c.h.b16 %v488
        %v1300 = vunpack.c.l.b16 %v489
        %v1301 = vunpack.c.h.b16 %v489
        %v1302 = vunpack.c.l.b16 %v490
        %v1303 = vunpack.c.h.b16 %v490
        %v1304 = vunpack.c.l.b16 %v491
        %v1305 = vunpack.c.h.b16 %v491
        %v1306 = vunpack.c.l.b16 %v492
        %v1307 = vunpack.c.h.b16 %v492
        %v1308 = vunpack.c.l.b16 %v493
        %v1309 = vunpack.c.h.b16 %v493
        %v1310 = vunpack.c.l.b16 %v494
        %v1311 = vunpack.c.h.b16 %v494
        %v1312 = vunpack.c.l.b16 %v495
        %v1313 = vunpack.c.h.b16 %v495
        %v1314 = vunpack.c.l.b16 %v496
        %v1315 = vunpack.c.h.b16 %v496
        %v1316 = vunpack.c.l.b16 %v497
        %v1317 = vunpack.c.h.b16 %v497
        %v1318 = vunpack.c.l.b16 %v498
        %v1319 = vunpack.c.h.b16 %v498
        %v1320 = vunpack.c.l.b16 %v499
        %v1321 = vunpack.c.h.b16 %v499
        %v1322 = vunpack.c.l.b16 %v500
        %v1323 = vunpack.c.h.b16 %v500
        %v1324 = vunpack.c.l.b16 %v501
        %v1325 = vunpack.c.h.b16 %v501
        %v1326 = vunpack.c.l.b16 %v502
        %v1327 = vunpack.c.h.b16 %v502
        %v1328 = vunpack.c.l.b16 %v503
        %v1329 = vunpack.c.h.b16 %v503
        %v1330 = vunpack.c.l.b16 %v504
        %v1331 = vunpack.c.h.b16 %v504
        %v1332 = vunpack.c.l.b16 %v505
        %v1333 = vunpack.c.h.b16 %v505
        %v1334 = vunpack.c.l.b16 %v506
        %v1335 = vunpack.c.h.b16 %v506
        %v1336 = vunpack.c.l.b16 %v507
        %v1337 = vunpack.c.h.b16 %v507
        %v1338 = vunpack.c.l.b16 %v508
        %v1339 = vunpack.c.h.b16 %v508
        %v1340 = vunpack.c.l.b16 %v509
        %v1341 = vunpack.c.h.b16 %v509
        %v1342 = vunpack.c.l.b16 %v510
        %v1343 = vunpack.c.h.b16 %v510
        %v1344 = vunpack.c.l.b16 %v511
        %v1345 = vunpack.c.h.b16 %v511
        %v1346 = vunpack.c.l.b16 %v512
        %v1347 = vunpack.c.h.b16 %v512
        %v1348 = vunpack.c.l.b16 %v513
        %v1349 = vunpack.c.h.b16 %v513
        %v1350 = vunpack.c.l.b16 %v514
        %v1351 = vunpack.c.h.b16 %v514
        %v1352 = vunpack.c.l.b16 %v515
        %v1353 = vunpack.c.h.b16 %v515
        %v1354 = vpack.c.b16 %v974, %v970
        %v1355 = vpack.c.b16 %v975, %v971
        %v1356 = vpack.c.b16 %v976, %v972
        %v1357 = vpack.c.b16 %v977, %v973
        %v1358 = vpack.c.b16 %v982, %v978
        %v1359 = vpack.c.b16 %v983, %v979
        %v1360 = vpack.c.b16 %v984, %v980
        %v1361 = vpack.c.b16 %v985, %v981
        %v1362 = vpack.c.b16 %v990, %v986
        %v1363 = vpack.c.b16 %v991, %v987
        %v1364 = vpack.c.b16 %v992, %v988
        %v1365 = vpack.c.b16 %v993, %v989
        %v1366 = vpack.c.b16 %v998, %v994
        %v1367 = vpack.c.b16 %v999, %v995
        %v1368 = vpack.c.b16 %v1000, %v996
        %v1369 = vpack.c.b16 %v1001, %v997
        %v1370 = vpack.c.b16 %v1006, %v1002
        %v1371 = vpack.c.b16 %v1007, %v1003
        %v1372 = vpack.c.b16 %v1008, %v1004
        %v1373 = vpack.c.b16 %v1009, %v1005
        %v1374 = vpack.c.b16 %v1014, %v1010
        %v1375 = vpack.c.b16 %v1015, %v1011
        %v1376 = vpack.c.b16 %v1016, %v1012
        %v1377 = vpack.c.b16 %v1017, %v1013
        %v1378 = vpack.c.b16 %v1022, %v1018
        %v1379 = vpack.c.b16 %v1023, %v1019
        %v1380 = vpack.c.b16 %v1024, %v1020
        %v1381 = vpack.c.b16 %v1025, %v1021
        %v1382 = vpack.c.b16 %v1030, %v1026
        %v1383 = vpack.c.b16 %v1031, %v1027
        %v1384 = vpack.c.b16 %v1032, %v1028
        %v1385 = vpack.c.b16 %v1033, %v1029
        %v1386 = vpack.c.b16 %v1038, %v1034
        %v1387 = vpack.c.b16 %v1039, %v1035
        %v1388 = vpack.c.b16 %v1040, %v1036
        %v1389 = vpack.c.b16 %v1041, %v1037
        %v1390 = vpack.c.b16 %v1046, %v1042
        %v1391 = vpack.c.b16 %v1047, %v1043
        %v1392 = vpack.c.b16 %v1048, %v1044
        %v1393 = vpack.c.b16 %v1049, %v1045
        %v1394 = vpack.c.b16 %v1054, %v1050
        %v1395 = vpack.c.b16 %v1055, %v1051
        %v1396 = vpack.c.b16 %v1056, %v1052
        %v1397 = vpack.c.b16 %v1057, %v1053
        %v1398 = vpack.c.b16 %v1062, %v1058
        %v1399 = vpack.c.b16 %v1063, %v1059
        %v1400 = vpack.c.b16 %v1064, %v1060
        %v1401 = vpack.c.b16 %v1065, %v1061
        %v1402 = vpack.c.b16 %v1070, %v1066
        %v1403 = vpack.c.b16 %v1071, %v1067
        %v1404 = vpack.c.b16 %v1072, %v1068
        %v1405 = vpack.c.b16 %v1073, %v1069
        %v1406 = vpack.c.b16 %v1078, %v1074
        %v1407 = vpack.c.b16 %v1079, %v1075
        %v1408 = vpack.c.b16 %v1080, %v1076
        %v1409 = vpack.c.b16 %v1081, %v1077
        %v1410 = vpack.c.b16 %v1086, %v1082
        %v1411 = vpack.c.b16 %v1087, %v1083
        %v1412 = vpack.c.b16 %v1088, %v1084
        %v1413 = vpack.c.b16 %v1089, %v1085
        %v1414 = vpack.c.b16 %v1094, %v1090
        %v1415 = vpack.c.b16 %v1095, %v1091
        %v1416 = vpack.c.b16 %v1096, %v1092
        %v1417 = vpack.c.b16 %v1097, %v1093
        %v1418 = vpack.c.b16 %v1102, %v1098
        %v1419 = vpack.c.b16 %v1103, %v1099
        %v1420 = vpack.c.b16 %v1104, %v1100
        %v1421 = vpack.c.b16 %v1105, %v1101
        %v1422 = vpack.c.b16 %v1110, %v1106
        %v1423 = vpack.c.b16 %v1111, %v1107
        %v1424 = vpack.c.b16 %v1112, %v1108
        %v1425 = vpack.c.b16 %v1113, %v1109
        %v1426 = vpack.c.b16 %v1118, %v1114
        %v1427 = vpack.c.b16 %v1119, %v1115
        %v1428 = vpack.c.b16 %v1120, %v1116
        %v1429 = vpack.c.b16 %v1121, %v1117
        %v1430 = vpack.c.b16 %v1126, %v1122
        %v1431 = vpack.c.b16 %v1127, %v1123
        %v1432 = vpack.c.b16 %v1128, %v1124
        %v1433 = vpack.c.b16 %v1129, %v1125
        %v1434 = vpack.c.b16 %v1134, %v1130
        %v1435 = vpack.c.b16 %v1135, %v1131
        %v1436 = vpack.c.b16 %v1136, %v1132
        %v1437 = vpack.c.b16 %v1137, %v1133
        %v1438 = vpack.c.b16 %v1142, %v1138
        %v1439 = vpack.c.b16 %v1143, %v1139
        %v1440 = vpack.c.b16 %v1144, %v1140
        %v1441 = vpack.c.b16 %v1145, %v1141
        %v1442 = vpack.c.b16 %v1150, %v1146
        %v1443 = vpack.c.b16 %v1151, %v1147
        %v1444 = vpack.c.b16 %v1152, %v1148
        %v1445 = vpack.c.b16 %v1153, %v1149
        %v1446 = vpack.c.b16 %v1158, %v1154
        %v1447 = vpack.c.b16 %v1159, %v1155
        %v1448 = vpack.c.b16 %v1160, %v1156
        %v1449 = vpack.c.b16 %v1161, %v1157
        %v1450 = vpack.c.b16 %v1166, %v1162
        %v1451 = vpack.c.b16 %v1167, %v1163
        %v1452 = vpack.c.b16 %v1168, %v1164
        %v1453 = vpack.c.b16 %v1169, %v1165
        %v1454 = vpack.c.b16 %v1174, %v1170
        %v1455 = vpack.c.b16 %v1175, %v1171
        %v1456 = vpack.c.b16 %v1176, %v1172
        %v1457 = vpack.c.b16 %v1177, %v1173
        %v1458 = vpack.c.b16 %v1182, %v1178
        %v1459 = vpack.c.b16 %v1183, %v1179
        %v1460 = vpack.c.b16 %v1184, %v1180
        %v1461 = vpack.c.b16 %v1185, %v1181
        %v1462 = vpack.c.b16 %v1190, %v1186
        %v1463 = vpack.c.b16 %v1191, %v1187
        %v1464 = vpack.c.b16 %v1192, %v1188
        %v1465 = vpack.c.b16 %v1193, %v1189
        %v1466 = vpack.c.b16 %v1198, %v1194
        %v1467 = vpack.c.b16 %v1199, %v1195
        %v1468 = vpack.c.b16 %v1200, %v1196
        %v1469 = vpack.c.b16 %v1201, %v1197
        %v1470 = vpack.c.b16 %v1206, %v1202
        %v1471 = vpack.c.b16 %v1207, %v1203
        %v1472 = vpack.c.b16 %v1208, %v1204
        %v1473 = vpack.c.b16 %v1209, %v1205
        %v1474 = vpack.c.b16 %v1214, %v1210
        %v1475 = vpack.c.b16 %v1215, %v1211
        %v1476 = vpack.c.b16 %v1216, %v1212
        %v1477 = vpack.c.b16 %v1217, %v1213
        %v1478 = vpack.c.b16 %v1222, %v1218
        %v1479 = vpack.c.b16 %v1223, %v1219
        %v1480 = vpack.c.b16 %v1224, %v1220
        %v1481 = vpack.c.b16 %v1225, %v1221
        %v1482 = vpack.c.b16 %v1230, %v1226
        %v1483 = vpack.c.b16 %v1231, %v1227
        %v1484 = vpack.c.b16 %v1232, %v1228
        %v1485 = vpack.c.b16 %v1233, %v1229
        %v1486 = vpack.c.b16 %v1238, %v1234
        %v1487 = vpack.c.b16 %v1239, %v1235
        %v1488 = vpack.c.b16 %v1240, %v1236
        %v1489 = vpack.c.b16 %v1241, %v1237
        %v1490 = vpack.c.b16 %v1246, %v1242
        %v1491 = vpack.c.b16 %v1247, %v1243
        %v1492 = vpack.c.b16 %v1248, %v1244
        %v1493 = vpack.c.b16 %v1249, %v1245
        %v1494 = vpack.c.b16 %v1254, %v1250
        %v1495 = vpack.c.b16 %v1255, %v1251
        %v1496 = vpack.c.b16 %v1256, %v1252
        %v1497 = vpack.c.b16 %v1257, %v1253
        %v1498 = vpack.c.b16 %v1262, %v1258
        %v1499 = vpack.c.b16 %v1263, %v1259
        %v1500 = vpack.c.b16 %v1264, %v1260
        %v1501 = vpack.c.b16 %v1265, %v1261
        %v1502 = vpack.c.b16 %v1270, %v1266
        %v1503 = vpack.c.b16 %v1271, %v1267
        %v1504 = vpack.c.b16 %v1272, %v1268
        %v1505 = vpack.c.b16 %v1273, %v1269
        %v1506 = vpack.c.b16 %v1278, %v1274
        %v1507 = vpack.c.b16 %v1279, %v1275
        %v1508 = vpack.c.b16 %v1280, %v1276
        %v1509 = vpack.c.b16 %v1281, %v1277
        %v1510 = vpack.c.b16 %v1286, %v1282
        %v1511 = vpack.c.b16 %v1287, %v1283
        %v1512 = vpack.c.b16 %v1288, %v1284
        %v1513 = vpack.c.b16 %v1289, %v1285
        %v1514 = vpack.c.b16 %v1294, %v1290
        %v1515 = vpack.c.b16 %v1295, %v1291
        %v1516 = vpack.c.b16 %v1296, %v1292
        %v1517 = vpack.c.b16 %v1297, %v1293
        %v1518 = vpack.c.b16 %v1302, %v1298
        %v1519 = vpack.c.b16 %v1303, %v1299
        %v1520 = vpack.c.b16 %v1304, %v1300
        %v1521 = vpack.c.b16 %v1305, %v1301
        %v1522 = vpack.c.b16 %v1310, %v1306
        %v1523 = vpack.c.b16 %v1311, %v1307
        %v1524 = vpack.c.b16 %v1312, %v1308
        %v1525 = vpack.c.b16 %v1313, %v1309
        %v1526 = vpack.c.b16 %v1318, %v1314
        %v1527 = vpack.c.b16 %v1319, %v1315
        %v1528 = vpack.c.b16 %v1320, %v1316
        %v1529 = vpack.c.b16 %v1321, %v1317
        %v1530 = vpack.c.b16 %v1326, %v1322
        %v1531 = vpack.c.b16 %v1327, %v1323
        %v1532 = vpack.c.b16 %v1328, %v1324
        %v1533 = vpack.c.b16 %v1329, %v1325
        %v1534 = vpack.c.b16 %v1334, %v1330
        %v1535 = vpack.c.b16 %v1335, %v1331
        %v1536 = vpack.c.b16 %v1336, %v1332
        %v1537 = vpack.c.b16 %v1337, %v1333
        %v1538 = vpack.c.b16 %v1342, %v1338
        %v1539 = vpack.c.b16 %v1343, %v1339
        %v1540 = vpack.c.b16 %v1344, %v1340
        %v1541 = vpack.c.b16 %v1345, %v1341
        %v1542 = vpack.c.b16 %v1350, %v1346
        %v1543 = vpack.c.b16 %v1351, %v1347
        %v1544 = vpack.c.b16 %v1352, %v1348
        %v1545 = vpack.c.b16 %v1353, %v1349
        %1738 = vmatprep.subr.bf16.mxu0 %v1355
        %1739 = vmatpush1.bf16.msra.mxu0 %v1354
        %1740 = vmatprep.subr.bf16.mxu0 %v1359
        %1741 = vmatpush1.bf16.msra.mxu0 %v1358
        %1742 = vmatprep.subr.bf16.mxu0 %v1363
        %1743 = vmatpush1.bf16.msra.mxu0 %v1362
        %1744 = vmatprep.subr.bf16.mxu0 %v1367
        %1745 = vmatpush1.bf16.msra.mxu0 %v1366
        %1746 = vmatprep.subr.bf16.mxu0 %v1371
        %1747 = vmatpush1.bf16.msra.mxu0 %v1370
        %1748 = vmatprep.subr.bf16.mxu0 %v1375
        %1749 = vmatpush1.bf16.msra.mxu0 %v1374
        %1750 = vmatprep.subr.bf16.mxu0 %v1379
        %1751 = vmatpush1.bf16.msra.mxu0 %v1378
        %1752 = vmatprep.subr.bf16.mxu0 %v1383
        %1753 = vmatpush1.bf16.msra.mxu0 %v1382
        %1754 = vmatprep.subr.bf16.mxu0 %v1387
        %1755 = vmatpush1.bf16.msra.mxu0 %v1386
        %1756 = vmatprep.subr.bf16.mxu0 %v1391
        %1757 = vmatpush1.bf16.msra.mxu0 %v1390
        %1758 = vmatprep.subr.bf16.mxu0 %v1395
        %1759 = vmatpush1.bf16.msra.mxu0 %v1394
        %1760 = vmatprep.subr.bf16.mxu0 %v1399
        %1761 = vmatpush1.bf16.msra.mxu0 %v1398
        %1762 = vmatprep.subr.bf16.mxu0 %v1403
        %1763 = vmatpush1.bf16.msra.mxu0 %v1402
        %1764 = vmatprep.subr.bf16.mxu0 %v1407
        %1765 = vmatpush1.bf16.msra.mxu0 %v1406
        %1766 = vmatprep.subr.bf16.mxu0 %v1411
        %1767 = vmatpush1.bf16.msra.mxu0 %v1410
        %1768 = vmatprep.subr.bf16.mxu0 %v1415
        %1769 = vmatpush1.bf16.msra.mxu0 %v1414
        %1770 = vmatprep.mubr.bf16.mxu0 %v683
        %1771 = vmatmul.mubr.bf16.gmra.mrb[0].mxu0 %v682
        %v1772 = vpop.f32.mrb[0].mxu0
        %v1773 = vadd.f32 %v521, %v1772
        %v1774 = vpop.f32.mrb[0].mxu0
        %v1775 = vadd.f32 %v525, %v1774
        %v1776 = vpop.f32.mrb[0].mxu0
        %v1777 = vadd.f32 %v521, %v1776
        %v1778 = vpop.f32.mrb[0].mxu0
        %v1779 = vadd.f32 %v525, %v1778
        %1780 = vmatprep.mubr.bf16.mxu0 %v689
        %1781 = vmatmul.mubr.bf16.gmra.mrb[0].mxu0 %v688
        %v1782 = vpop.f32.mrb[0].mxu0
        %v1783 = vadd.f32 %v521, %v1782
        %v1784 = vpop.f32.mrb[0].mxu0
        %v1785 = vadd.f32 %v525, %v1784
        %v1786 = vpop.f32.mrb[0].mxu0
        %v1787 = vadd.f32 %v521, %v1786
        %v1788 = vpop.f32.mrb[0].mxu0
        %v1789 = vadd.f32 %v525, %v1788
        %1790 = vmatprep.mubr.bf16.mxu0 %v695
        %1791 = vmatmul.mubr.bf16.gmra.mrb[0].mxu0 %v694
        %v1792 = vpop.f32.mrb[0].mxu0
        %v1793 = vadd.f32 %v521, %v1792
        %v1794 = vpop.f32.mrb[0].mxu0
        %v1795 = vadd.f32 %v525, %v1794
        %v1796 = vpop.f32.mrb[0].mxu0
        %v1797 = vadd.f32 %v521, %v1796
        %v1798 = vpop.f32.mrb[0].mxu0
        %v1799 = vadd.f32 %v525, %v1798
        %1800 = vmatprep.mubr.bf16.mxu0 %v701
        %1801 = vmatmul.mubr.bf16.gmra.mrb[0].mxu0 %v700
        %v1802 = vpop.f32.mrb[0].mxu0
        %v1803 = vadd.f32 %v521, %v1802
        %v1804 = vpop.f32.mrb[0].mxu0
        %v1805 = vadd.f32 %v525, %v1804
        %v1806 = vpop.f32.mrb[0].mxu0
        %v1807 = vadd.f32 %v521, %v1806
        %v1808 = vpop.f32.mrb[0].mxu0
        %v1809 = vadd.f32 %v525, %v1808
        %1810 = vmatprep.mubr.bf16.mxu0 %v707
        %1811 = vmatmul.mubr.bf16.gmra.mrb[0].mxu0 %v706
        %v1812 = vpop.f32.mrb[0].mxu0
        %v1813 = vadd.f32 %v521, %v1812
        %v1814 = vpop.f32.mrb[0].mxu0
        %v1815 = vadd.f32 %v525, %v1814
        %v1816 = vpop.f32.mrb[0].mxu0
        %v1817 = vadd.f32 %v521, %v1816
        %v1818 = vpop.f32.mrb[0].mxu0
        %v1819 = vadd.f32 %v525, %v1818
        %1820 = vmatprep.mubr.bf16.mxu0 %v713
        %1821 = vmatmul.mubr.bf16.gmra.mrb[0].mxu0 %v712
        %v1822 = vpop.f32.mrb[0].mxu0
        %v1823 = vadd.f32 %v521, %v1822
        %v1824 = vpop.f32.mrb[0].mxu0
        %v1825 = vadd.f32 %v525, %v1824
        %v1826 = vpop.f32.mrb[0].mxu0
        %v1827 = vadd.f32 %v521, %v1826
        %v1828 = vpop.f32.mrb[0].mxu0
        %v1829 = vadd.f32 %v525, %v1828
        %1830 = vmatprep.mubr.bf16.mxu0 %v719
        %1831 = vmatmul.mubr.bf16.gmra.mrb[0].mxu0 %v718
        %v1832 = vpop.f32.mrb[0].mxu0
        %v1833 = vadd.f32 %v521, %v1832
        %v1834 = vpop.f32.mrb[0].mxu0
        %v1835 = vadd.f32 %v525, %v1834
        %v1836 = vpop.f32.mrb[0].mxu0
        %v1837 = vadd.f32 %v521, %v1836
        %v1838 = vpop.f32.mrb[0].mxu0
        %v1839 = vadd.f32 %v525, %v1838
        %1840 = vmatprep.mubr.bf16.mxu0 %v725
        %1841 = vmatmul.mubr.bf16.gmra.mrb[0].mxu0 %v724
        %v1842 = vpop.f32.mrb[0].mxu0
        %v1843 = vadd.f32 %v521, %v1842
        %v1844 = vpop.f32.mrb[0].mxu0
        %v1845 = vadd.f32 %v525, %v1844
        %v1846 = vpop.f32.mrb[0].mxu0
        %v1847 = vadd.f32 %v521, %v1846
        %v1848 = vpop.f32.mrb[0].mxu0
        %v1849 = vadd.f32 %v525, %v1848
        %1850 = vdwg.mxu0
        %1851 = vmatprep.subr.bf16.mxu0 %v1419
        %1852 = vmatpush1.bf16.msra.mxu0 %v1418
        %1853 = vmatprep.subr.bf16.mxu0 %v1423
        %1854 = vmatpush1.bf16.msra.mxu0 %v1422
        %1855 = vmatprep.subr.bf16.mxu0 %v1427
        %1856 = vmatpush1.bf16.msra.mxu0 %v1426
        %1857 = vmatprep.subr.bf16.mxu0 %v1431
        %1858 = vmatpush1.bf16.msra.mxu0 %v1430
        %1859 = vmatprep.subr.bf16.mxu0 %v1435
        %1860 = vmatpush1.bf16.msra.mxu0 %v1434
        %1861 = vmatprep.subr.bf16.mxu0 %v1439
        %1862 = vmatpush1.bf16.msra.mxu0 %v1438
        %1863 = vmatprep.subr.bf16.mxu0 %v1443
        %1864 = vmatpush1.bf16.msra.mxu0 %v1442
        %1865 = vmatprep.subr.bf16.mxu0 %v1447
        %1866 = vmatpush1.bf16.msra.mxu0 %v1446
        %1867 = vmatprep.subr.bf16.mxu0 %v1451
        %1868 = vmatpush1.bf16.msra.mxu0 %v1450
        %1869 = vmatprep.subr.bf16.mxu0 %v1455
        %1870 = vmatpush1.bf16.msra.mxu0 %v1454
        %1871 = vmatprep.subr.bf16.mxu0 %v1459
        %1872 = vmatpush1.bf16.msra.mxu0 %v1458
        %1873 = vmatprep.subr.bf16.mxu0 %v1463
        %1874 = vmatpush1.bf16.msra.mxu0 %v1462
        %1875 = vmatprep.subr.bf16.mxu0 %v1467
        %1876 = vmatpush1.bf16.msra.mxu0 %v1466
        %1877 = vmatprep.subr.bf16.mxu0 %v1471
        %1878 = vmatpush1.bf16.msra.mxu0 %v1470
        %1879 = vmatprep.subr.bf16.mxu0 %v1475
        %1880 = vmatpush1.bf16.msra.mxu0 %v1474
        %1881 = vmatprep.subr.bf16.mxu0 %v1479
        %1882 = vmatpush1.bf16.msra.mxu0 %v1478
        %1883 = vmatprep.mubr.bf16.mxu0 %v685
        %1884 = vmatmul.mubr.bf16.gmra.mrb[0].mxu0 %v684
        %v1885 = vpop.f32.mrb[0].mxu0
        %v1886 = vadd.f32 %v1773, %v1885
        %v1887 = vpop.f32.mrb[0].mxu0
        %v1888 = vadd.f32 %v1775, %v1887
        %v1889 = vpop.f32.mrb[0].mxu0
        %v1890 = vadd.f32 %v1777, %v1889
        %v1891 = vpop.f32.mrb[0].mxu0
        %v1892 = vadd.f32 %v1779, %v1891
        %1893 = vmatprep.mubr.bf16.mxu0 %v691
        %1894 = vmatmul.mubr.bf16.gmra.mrb[0].mxu0 %v690
        %v1895 = vpop.f32.mrb[0].mxu0
        %v1896 = vadd.f32 %v1783, %v1895
        %v1897 = vpop.f32.mrb[0].mxu0
        %v1898 = vadd.f32 %v1785, %v1897
        %v1899 = vpop.f32.mrb[0].mxu0
        %v1900 = vadd.f32 %v1787, %v1899
        %v1901 = vpop.f32.mrb[0].mxu0
        %v1902 = vadd.f32 %v1789, %v1901
        %1903 = vmatprep.mubr.bf16.mxu0 %v697
        %1904 = vmatmul.mubr.bf16.gmra.mrb[0].mxu0 %v696
        %v1905 = vpop.f32.mrb[0].mxu0
        %v1906 = vadd.f32 %v1793, %v1905
        %v1907 = vpop.f32.mrb[0].mxu0
        %v1908 = vadd.f32 %v1795, %v1907
        %v1909 = vpop.f32.mrb[0].mxu0
        %v1910 = vadd.f32 %v1797, %v1909
        %v1911 = vpop.f32.mrb[0].mxu0
        %v1912 = vadd.f32 %v1799, %v1911
        %1913 = vmatprep.mubr.bf16.mxu0 %v703
        %1914 = vmatmul.mubr.bf16.gmra.mrb[0].mxu0 %v702
        %v1915 = vpop.f32.mrb[0].mxu0
        %v1916 = vadd.f32 %v1803, %v1915
        %v1917 = vpop.f32.mrb[0].mxu0
        %v1918 = vadd.f32 %v1805, %v1917
        %v1919 = vpop.f32.mrb[0].mxu0
        %v1920 = vadd.f32 %v1807, %v1919
        %v1921 = vpop.f32.mrb[0].mxu0
        %v1922 = vadd.f32 %v1809, %v1921
        %1923 = vmatprep.mubr.bf16.mxu0 %v709
        %1924 = vmatmul.mubr.bf16.gmra.mrb[0].mxu0 %v708
        %v1925 = vpop.f32.mrb[0].mxu0
        %v1926 = vadd.f32 %v1813, %v1925
        %v1927 = vpop.f32.mrb[0].mxu0
        %v1928 = vadd.f32 %v1815, %v1927
        %v1929 = vpop.f32.mrb[0].mxu0
        %v1930 = vadd.f32 %v1817, %v1929
        %v1931 = vpop.f32.mrb[0].mxu0
        %v1932 = vadd.f32 %v1819, %v1931
        %1933 = vmatprep.mubr.bf16.mxu0 %v715
        %1934 = vmatmul.mubr.bf16.gmra.mrb[0].mxu0 %v714
        %v1935 = vpop.f32.mrb[0].mxu0
        %v1936 = vadd.f32 %v1823, %v1935
        %v1937 = vpop.f32.mrb[0].mxu0
        %v1938 = vadd.f32 %v1825, %v1937
        %v1939 = vpop.f32.mrb[0].mxu0
        %v1940 = vadd.f32 %v1827, %v1939
        %v1941 = vpop.f32.mrb[0].mxu0
        %v1942 = vadd.f32 %v1829, %v1941
        %1943 = vmatprep.mubr.bf16.mxu0 %v721
        %1944 = vmatmul.mubr.bf16.gmra.mrb[0].mxu0 %v720
        %v1945 = vpop.f32.mrb[0].mxu0
        %v1946 = vadd.f32 %v1833, %v1945
        %v1947 = vpop.f32.mrb[0].mxu0
        %v1948 = vadd.f32 %v1835, %v1947
        %v1949 = vpop.f32.mrb[0].mxu0
        %v1950 = vadd.f32 %v1837, %v1949
        %v1951 = vpop.f32.mrb[0].mxu0
        %v1952 = vadd.f32 %v1839, %v1951
        %1953 = vmatprep.mubr.bf16.mxu0 %v727
        %1954 = vmatmul.mubr.bf16.gmra.mrb[0].mxu0 %v726
        %v1955 = vpop.f32.mrb[0].mxu0
        %v1956 = vadd.f32 %v1843, %v1955
        %v1957 = vpop.f32.mrb[0].mxu0
        %v1958 = vadd.f32 %v1845, %v1957
        %v1959 = vpop.f32.mrb[0].mxu0
        %v1960 = vadd.f32 %v1847, %v1959
        %v1961 = vpop.f32.mrb[0].mxu0
        %v1962 = vadd.f32 %v1849, %v1961
        %1963 = vdwg.mxu0
        %1964 = vmatprep.subr.bf16.mxu0 %v1483
        %1965 = vmatpush1.bf16.msra.mxu0 %v1482
        %1966 = vmatprep.subr.bf16.mxu0 %v1487
        %1967 = vmatpush1.bf16.msra.mxu0 %v1486
        %1968 = vmatprep.subr.bf16.mxu0 %v1491
        %1969 = vmatpush1.bf16.msra.mxu0 %v1490
        %1970 = vmatprep.subr.bf16.mxu0 %v1495
        %1971 = vmatpush1.bf16.msra.mxu0 %v1494
        %1972 = vmatprep.subr.bf16.mxu0 %v1499
        %1973 = vmatpush1.bf16.msra.mxu0 %v1498
        %1974 = vmatprep.subr.bf16.mxu0 %v1503
        %1975 = vmatpush1.bf16.msra.mxu0 %v1502
        %1976 = vmatprep.subr.bf16.mxu0 %v1507
        %1977 = vmatpush1.bf16.msra.mxu0 %v1506
        %1978 = vmatprep.subr.bf16.mxu0 %v1511
        %1979 = vmatpush1.bf16.msra.mxu0 %v1510
        %1980 = vmatprep.subr.bf16.mxu0 %v1515
        %1981 = vmatpush1.bf16.msra.mxu0 %v1514
        %1982 = vmatprep.subr.bf16.mxu0 %v1519
        %1983 = vmatpush1.bf16.msra.mxu0 %v1518
        %1984 = vmatprep.subr.bf16.mxu0 %v1523
        %1985 = vmatpush1.bf16.msra.mxu0 %v1522
        %1986 = vmatprep.subr.bf16.mxu0 %v1527
        %1987 = vmatpush1.bf16.msra.mxu0 %v1526
        %1988 = vmatprep.subr.bf16.mxu0 %v1531
        %1989 = vmatpush1.bf16.msra.mxu0 %v1530
        %1990 = vmatprep.subr.bf16.mxu0 %v1535
        %1991 = vmatpush1.bf16.msra.mxu0 %v1534
        %1992 = vmatprep.subr.bf16.mxu0 %v1539
        %1993 = vmatpush1.bf16.msra.mxu0 %v1538
        %1994 = vmatprep.subr.bf16.mxu0 %v1543
        %1995 = vmatpush1.bf16.msra.mxu0 %v1542
        %1996 = vmatprep.mubr.bf16.mxu0 %v687
        %1997 = vmatmul.mubr.bf16.gmra.mrb[0].mxu0 %v686
        %v1998 = vpop.f32.mrb[0].mxu0
        %v1999 = vadd.f32 %v1886, %v1998
        %v2000 = vpop.f32.mrb[0].mxu0
        %v2001 = vadd.f32 %v1888, %v2000
        %v2002 = vpop.f32.mrb[0].mxu0
        %v2003 = vadd.f32 %v1890, %v2002
        %v2004 = vpop.f32.mrb[0].mxu0
        %v2005 = vadd.f32 %v1892, %v2004
        %2006 = vmatprep.mubr.bf16.mxu0 %v693
        %2007 = vmatmul.mubr.bf16.gmra.mrb[0].mxu0 %v692
        %v2008 = vpop.f32.mrb[0].mxu0
        %v2009 = vadd.f32 %v1896, %v2008
        %v2010 = vpop.f32.mrb[0].mxu0
        %v2011 = vadd.f32 %v1898, %v2010
        %v2012 = vpop.f32.mrb[0].mxu0
        %v2013 = vadd.f32 %v1900, %v2012
        %v2014 = vpop.f32.mrb[0].mxu0
        %v2015 = vadd.f32 %v1902, %v2014
        %2016 = vmatprep.mubr.bf16.mxu0 %v699
        %2017 = vmatmul.mubr.bf16.gmra.mrb[0].mxu0 %v698
        %v2018 = vpop.f32.mrb[0].mxu0
        %v2019 = vadd.f32 %v1906, %v2018
        %v2020 = vpop.f32.mrb[0].mxu0
        %v2021 = vadd.f32 %v1908, %v2020
        %v2022 = vpop.f32.mrb[0].mxu0
        %v2023 = vadd.f32 %v1910, %v2022
        %v2024 = vpop.f32.mrb[0].mxu0
        %v2025 = vadd.f32 %v1912, %v2024
        %2026 = vmatprep.mubr.bf16.mxu0 %v705
        %2027 = vmatmul.mubr.bf16.gmra.mrb[0].mxu0 %v704
        %v2028 = vpop.f32.mrb[0].mxu0
        %v2029 = vadd.f32 %v1916, %v2028
        %v2030 = vpop.f32.mrb[0].mxu0
        %v2031 = vadd.f32 %v1918, %v2030
        %v2032 = vpop.f32.mrb[0].mxu0
        %v2033 = vadd.f32 %v1920, %v2032
        %v2034 = vpop.f32.mrb[0].mxu0
        %v2035 = vadd.f32 %v1922, %v2034
        %2036 = vmatprep.mubr.bf16.mxu0 %v711
        %2037 = vmatmul.mubr.bf16.gmra.mrb[0].mxu0 %v710
        %v2038 = vpop.f32.mrb[0].mxu0
        %v2039 = vadd.f32 %v1926, %v2038
        %v2040 = vpop.f32.mrb[0].mxu0
        %v2041 = vadd.f32 %v1928, %v2040
        %v2042 = vpop.f32.mrb[0].mxu0
        %v2043 = vadd.f32 %v1930, %v2042
        %v2044 = vpop.f32.mrb[0].mxu0
        %v2045 = vadd.f32 %v1932, %v2044
        %2046 = vmatprep.mubr.bf16.mxu0 %v717
        %2047 = vmatmul.mubr.bf16.gmra.mrb[0].mxu0 %v716
        %v2048 = vpop.f32.mrb[0].mxu0
        %v2049 = vadd.f32 %v1936, %v2048
        %v2050 = vpop.f32.mrb[0].mxu0
        %v2051 = vadd.f32 %v1938, %v2050
        %v2052 = vpop.f32.mrb[0].mxu0
        %v2053 = vadd.f32 %v1940, %v2052
        %v2054 = vpop.f32.mrb[0].mxu0
        %v2055 = vadd.f32 %v1942, %v2054
        %2056 = vmatprep.mubr.bf16.mxu0 %v723
        %2057 = vmatmul.mubr.bf16.gmra.mrb[0].mxu0 %v722
        %v2058 = vpop.f32.mrb[0].mxu0
        %v2059 = vadd.f32 %v1946, %v2058
        %v2060 = vpop.f32.mrb[0].mxu0
        %v2061 = vadd.f32 %v1948, %v2060
        %v2062 = vpop.f32.mrb[0].mxu0
        %v2063 = vadd.f32 %v1950, %v2062
        %v2064 = vpop.f32.mrb[0].mxu0
        %v2065 = vadd.f32 %v1952, %v2064
        %2066 = vmatprep.mubr.bf16.mxu0 %v729
        %2067 = vmatmul.mubr.bf16.gmra.mrb[0].mxu0 %v728
        %v2068 = vpop.f32.mrb[0].mxu0
        %v2069 = vadd.f32 %v1956, %v2068
        %v2070 = vpop.f32.mrb[0].mxu0
        %v2071 = vadd.f32 %v1958, %v2070
        %v2072 = vpop.f32.mrb[0].mxu0
        %v2073 = vadd.f32 %v1960, %v2072
        %v2074 = vpop.f32.mrb[0].mxu0
        %v2075 = vadd.f32 %v1962, %v2074
        %2076 = vdwg.mxu0
        %2077 = vmatprep.subr.bf16.mxu0 %v1357
        %2078 = vmatpush1.bf16.msra.mxu0 %v1356
        %2079 = vmatprep.subr.bf16.mxu0 %v1361
        %2080 = vmatpush1.bf16.msra.mxu0 %v1360
        %2081 = vmatprep.subr.bf16.mxu0 %v1365
        %2082 = vmatpush1.bf16.msra.mxu0 %v1364
        %2083 = vmatprep.subr.bf16.mxu0 %v1369
        %2084 = vmatpush1.bf16.msra.mxu0 %v1368
        %2085 = vmatprep.subr.bf16.mxu0 %v1373
        %2086 = vmatpush1.bf16.msra.mxu0 %v1372
        %2087 = vmatprep.subr.bf16.mxu0 %v1377
        %2088 = vmatpush1.bf16.msra.mxu0 %v1376
        %2089 = vmatprep.subr.bf16.mxu0 %v1381
        %2090 = vmatpush1.bf16.msra.mxu0 %v1380
        %2091 = vmatprep.subr.bf16.mxu0 %v1385
        %2092 = vmatpush1.bf16.msra.mxu0 %v1384
        %2093 = vmatprep.subr.bf16.mxu0 %v1389
        %2094 = vmatpush1.bf16.msra.mxu0 %v1388
        %2095 = vmatprep.subr.bf16.mxu0 %v1393
        %2096 = vmatpush1.bf16.msra.mxu0 %v1392
        %2097 = vmatprep.subr.bf16.mxu0 %v1397
        %2098 = vmatpush1.bf16.msra.mxu0 %v1396
        %2099 = vmatprep.subr.bf16.mxu0 %v1401
        %2100 = vmatpush1.bf16.msra.mxu0 %v1400
        %2101 = vmatprep.subr.bf16.mxu0 %v1405
        %2102 = vmatpush1.bf16.msra.mxu0 %v1404
        %2103 = vmatprep.subr.bf16.mxu0 %v1409
        %2104 = vmatpush1.bf16.msra.mxu0 %v1408
        %2105 = vmatprep.subr.bf16.mxu0 %v1413
        %2106 = vmatpush1.bf16.msra.mxu0 %v1412
        %2107 = vmatprep.subr.bf16.mxu0 %v1417
        %2108 = vmatpush1.bf16.msra.mxu0 %v1416
        %2109 = vmatprep.mubr.bf16.mxu0 %v683
        %2110 = vmatmul.mubr.bf16.gmra.mrb[0].mxu0 %v682
        %v2111 = vpop.f32.mrb[0].mxu0
        %v2112 = vadd.f32 %v529, %v2111
        %v2113 = vpop.f32.mrb[0].mxu0
        %v2114 = vadd.f32 %v533, %v2113
        %v2115 = vpop.f32.mrb[0].mxu0
        %v2116 = vadd.f32 %v529, %v2115
        %v2117 = vpop.f32.mrb[0].mxu0
        %v2118 = vadd.f32 %v533, %v2117
        %2119 = vmatprep.mubr.bf16.mxu0 %v689
        %2120 = vmatmul.mubr.bf16.gmra.mrb[0].mxu0 %v688
        %v2121 = vpop.f32.mrb[0].mxu0
        %v2122 = vadd.f32 %v529, %v2121
        %v2123 = vpop.f32.mrb[0].mxu0
        %v2124 = vadd.f32 %v533, %v2123
        %v2125 = vpop.f32.mrb[0].mxu0
        %v2126 = vadd.f32 %v529, %v2125
        %v2127 = vpop.f32.mrb[0].mxu0
        %v2128 = vadd.f32 %v533, %v2127
        %2129 = vmatprep.mubr.bf16.mxu0 %v695
        %2130 = vmatmul.mubr.bf16.gmra.mrb[0].mxu0 %v694
        %v2131 = vpop.f32.mrb[0].mxu0
        %v2132 = vadd.f32 %v529, %v2131
        %v2133 = vpop.f32.mrb[0].mxu0
        %v2134 = vadd.f32 %v533, %v2133
        %v2135 = vpop.f32.mrb[0].mxu0
        %v2136 = vadd.f32 %v529, %v2135
        %v2137 = vpop.f32.mrb[0].mxu0
        %v2138 = vadd.f32 %v533, %v2137
        %2139 = vmatprep.mubr.bf16.mxu0 %v701
        %2140 = vmatmul.mubr.bf16.gmra.mrb[0].mxu0 %v700
        %v2141 = vpop.f32.mrb[0].mxu0
        %v2142 = vadd.f32 %v529, %v2141
        %v2143 = vpop.f32.mrb[0].mxu0
        %v2144 = vadd.f32 %v533, %v2143
        %v2145 = vpop.f32.mrb[0].mxu0
        %v2146 = vadd.f32 %v529, %v2145
        %v2147 = vpop.f32.mrb[0].mxu0
        %v2148 = vadd.f32 %v533, %v2147
        %2149 = vmatprep.mubr.bf16.mxu0 %v707
        %2150 = vmatmul.mubr.bf16.gmra.mrb[0].mxu0 %v706
        %v2151 = vpop.f32.mrb[0].mxu0
        %v2152 = vadd.f32 %v529, %v2151
        %v2153 = vpop.f32.mrb[0].mxu0
        %v2154 = vadd.f32 %v533, %v2153
        %v2155 = vpop.f32.mrb[0].mxu0
        %v2156 = vadd.f32 %v529, %v2155
        %v2157 = vpop.f32.mrb[0].mxu0
        %v2158 = vadd.f32 %v533, %v2157
        %2159 = vmatprep.mubr.bf16.mxu0 %v713
        %2160 = vmatmul.mubr.bf16.gmra.mrb[0].mxu0 %v712
        %v2161 = vpop.f32.mrb[0].mxu0
        %v2162 = vadd.f32 %v529, %v2161
        %v2163 = vpop.f32.mrb[0].mxu0
        %v2164 = vadd.f32 %v533, %v2163
        %v2165 = vpop.f32.mrb[0].mxu0
        %v2166 = vadd.f32 %v529, %v2165
        %v2167 = vpop.f32.mrb[0].mxu0
        %v2168 = vadd.f32 %v533, %v2167
        %2169 = vmatprep.mubr.bf16.mxu0 %v719
        %2170 = vmatmul.mubr.bf16.gmra.mrb[0].mxu0 %v718
        %v2171 = vpop.f32.mrb[0].mxu0
        %v2172 = vadd.f32 %v529, %v2171
        %v2173 = vpop.f32.mrb[0].mxu0
        %v2174 = vadd.f32 %v533, %v2173
        %v2175 = vpop.f32.mrb[0].mxu0
        %v2176 = vadd.f32 %v529, %v2175
        %v2177 = vpop.f32.mrb[0].mxu0
        %v2178 = vadd.f32 %v533, %v2177
        %2179 = vmatprep.mubr.bf16.mxu0 %v725
        %2180 = vmatmul.mubr.bf16.gmra.mrb[0].mxu0 %v724
        %v2181 = vpop.f32.mrb[0].mxu0
        %v2182 = vadd.f32 %v529, %v2181
        %v2183 = vpop.f32.mrb[0].mxu0
        %v2184 = vadd.f32 %v533, %v2183
        %v2185 = vpop.f32.mrb[0].mxu0
        %v2186 = vadd.f32 %v529, %v2185
        %v2187 = vpop.f32.mrb[0].mxu0
        %v2188 = vadd.f32 %v533, %v2187
        %2189 = vdwg.mxu0
        %2190 = vmatprep.subr.bf16.mxu0 %v1421
        %2191 = vmatpush1.bf16.msra.mxu0 %v1420
        %2192 = vmatprep.subr.bf16.mxu0 %v1425
        %2193 = vmatpush1.bf16.msra.mxu0 %v1424
        %2194 = vmatprep.subr.bf16.mxu0 %v1429
        %2195 = vmatpush1.bf16.msra.mxu0 %v1428
        %2196 = vmatprep.subr.bf16.mxu0 %v1433
        %2197 = vmatpush1.bf16.msra.mxu0 %v1432
        %2198 = vmatprep.subr.bf16.mxu0 %v1437
        %2199 = vmatpush1.bf16.msra.mxu0 %v1436
        %2200 = vmatprep.subr.bf16.mxu0 %v1441
        %2201 = vmatpush1.bf16.msra.mxu0 %v1440
        %2202 = vmatprep.subr.bf16.mxu0 %v1445
        %2203 = vmatpush1.bf16.msra.mxu0 %v1444
        %2204 = vmatprep.subr.bf16.mxu0 %v1449
        %2205 = vmatpush1.bf16.msra.mxu0 %v1448
        %2206 = vmatprep.subr.bf16.mxu0 %v1453
        %2207 = vmatpush1.bf16.msra.mxu0 %v1452
        %2208 = vmatprep.subr.bf16.mxu0 %v1457
        %2209 = vmatpush1.bf16.msra.mxu0 %v1456
        %2210 = vmatprep.subr.bf16.mxu0 %v1461
        %2211 = vmatpush1.bf16.msra.mxu0 %v1460
        %2212 = vmatprep.subr.bf16.mxu0 %v1465
        %2213 = vmatpush1.bf16.msra.mxu0 %v1464
        %2214 = vmatprep.subr.bf16.mxu0 %v1469
        %2215 = vmatpush1.bf16.msra.mxu0 %v1468
        %2216 = vmatprep.subr.bf16.mxu0 %v1473
        %2217 = vmatpush1.bf16.msra.mxu0 %v1472
        %2218 = vmatprep.subr.bf16.mxu0 %v1477
        %2219 = vmatpush1.bf16.msra.mxu0 %v1476
        %2220 = vmatprep.subr.bf16.mxu0 %v1481
        %2221 = vmatpush1.bf16.msra.mxu0 %v1480
        %2222 = vmatprep.mubr.bf16.mxu0 %v685
        %2223 = vmatmul.mubr.bf16.gmra.mrb[0].mxu0 %v684
        %v2224 = vpop.f32.mrb[0].mxu0
        %v2225 = vadd.f32 %v2112, %v2224
        %v2226 = vpop.f32.mrb[0].mxu0
        %v2227 = vadd.f32 %v2114, %v2226
        %v2228 = vpop.f32.mrb[0].mxu0
        %v2229 = vadd.f32 %v2116, %v2228
        %v2230 = vpop.f32.mrb[0].mxu0
        %v2231 = vadd.f32 %v2118, %v2230
        %2232 = vmatprep.mubr.bf16.mxu0 %v691
        %2233 = vmatmul.mubr.bf16.gmra.mrb[0].mxu0 %v690
        %v2234 = vpop.f32.mrb[0].mxu0
        %v2235 = vadd.f32 %v2122, %v2234
        %v2236 = vpop.f32.mrb[0].mxu0
        %v2237 = vadd.f32 %v2124, %v2236
        %v2238 = vpop.f32.mrb[0].mxu0
        %v2239 = vadd.f32 %v2126, %v2238
        %v2240 = vpop.f32.mrb[0].mxu0
        %v2241 = vadd.f32 %v2128, %v2240
        %2242 = vmatprep.mubr.bf16.mxu0 %v697
        %2243 = vmatmul.mubr.bf16.gmra.mrb[0].mxu0 %v696
        %v2244 = vpop.f32.mrb[0].mxu0
        %v2245 = vadd.f32 %v2132, %v2244
        %v2246 = vpop.f32.mrb[0].mxu0
        %v2247 = vadd.f32 %v2134, %v2246
        %v2248 = vpop.f32.mrb[0].mxu0
        %v2249 = vadd.f32 %v2136, %v2248
        %v2250 = vpop.f32.mrb[0].mxu0
        %v2251 = vadd.f32 %v2138, %v2250
        %2252 = vmatprep.mubr.bf16.mxu0 %v703
        %2253 = vmatmul.mubr.bf16.gmra.mrb[0].mxu0 %v702
        %v2254 = vpop.f32.mrb[0].mxu0
        %v2255 = vadd.f32 %v2142, %v2254
        %v2256 = vpop.f32.mrb[0].mxu0
        %v2257 = vadd.f32 %v2144, %v2256
        %v2258 = vpop.f32.mrb[0].mxu0
        %v2259 = vadd.f32 %v2146, %v2258
        %v2260 = vpop.f32.mrb[0].mxu0
        %v2261 = vadd.f32 %v2148, %v2260
        %2262 = vmatprep.mubr.bf16.mxu0 %v709
        %2263 = vmatmul.mubr.bf16.gmra.mrb[0].mxu0 %v708
        %v2264 = vpop.f32.mrb[0].mxu0
        %v2265 = vadd.f32 %v2152, %v2264
        %v2266 = vpop.f32.mrb[0].mxu0
        %v2267 = vadd.f32 %v2154, %v2266
        %v2268 = vpop.f32.mrb[0].mxu0
        %v2269 = vadd.f32 %v2156, %v2268
        %v2270 = vpop.f32.mrb[0].mxu0
        %v2271 = vadd.f32 %v2158, %v2270
        %2272 = vmatprep.mubr.bf16.mxu0 %v715
        %2273 = vmatmul.mubr.bf16.gmra.mrb[0].mxu0 %v714
        %v2274 = vpop.f32.mrb[0].mxu0
        %v2275 = vadd.f32 %v2162, %v2274
        %v2276 = vpop.f32.mrb[0].mxu0
        %v2277 = vadd.f32 %v2164, %v2276
        %v2278 = vpop.f32.mrb[0].mxu0
        %v2279 = vadd.f32 %v2166, %v2278
        %v2280 = vpop.f32.mrb[0].mxu0
        %v2281 = vadd.f32 %v2168, %v2280
        %2282 = vmatprep.mubr.bf16.mxu0 %v721
        %2283 = vmatmul.mubr.bf16.gmra.mrb[0].mxu0 %v720
        %v2284 = vpop.f32.mrb[0].mxu0
        %v2285 = vadd.f32 %v2172, %v2284
        %v2286 = vpop.f32.mrb[0].mxu0
        %v2287 = vadd.f32 %v2174, %v2286
        %v2288 = vpop.f32.mrb[0].mxu0
        %v2289 = vadd.f32 %v2176, %v2288
        %v2290 = vpop.f32.mrb[0].mxu0
        %v2291 = vadd.f32 %v2178, %v2290
        %2292 = vmatprep.mubr.bf16.mxu0 %v727
        %2293 = vmatmul.mubr.bf16.gmra.mrb[0].mxu0 %v726
        %v2294 = vpop.f32.mrb[0].mxu0
        %v2295 = vadd.f32 %v2182, %v2294
        %v2296 = vpop.f32.mrb[0].mxu0
        %v2297 = vadd.f32 %v2184, %v2296
        %v2298 = vpop.f32.mrb[0].mxu0
        %v2299 = vadd.f32 %v2186, %v2298
        %v2300 = vpop.f32.mrb[0].mxu0
        %v2301 = vadd.f32 %v2188, %v2300
        %2302 = vdwg.mxu0
        %2303 = vmatprep.subr.bf16.mxu0 %v1485
        %2304 = vmatpush1.bf16.msra.mxu0 %v1484
        %2305 = vmatprep.subr.bf16.mxu0 %v1489
        %2306 = vmatpush1.bf16.msra.mxu0 %v1488
        %2307 = vmatprep.subr.bf16.mxu0 %v1493
        %2308 = vmatpush1.bf16.msra.mxu0 %v1492
        %2309 = vmatprep.subr.bf16.mxu0 %v1497
        %2310 = vmatpush1.bf16.msra.mxu0 %v1496
        %2311 = vmatprep.subr.bf16.mxu0 %v1501
        %2312 = vmatpush1.bf16.msra.mxu0 %v1500
        %2313 = vmatprep.subr.bf16.mxu0 %v1505
        %2314 = vmatpush1.bf16.msra.mxu0 %v1504
        %2315 = vmatprep.subr.bf16.mxu0 %v1509
        %2316 = vmatpush1.bf16.msra.mxu0 %v1508
        %2317 = vmatprep.subr.bf16.mxu0 %v1513
        %2318 = vmatpush1.bf16.msra.mxu0 %v1512
        %2319 = vmatprep.subr.bf16.mxu0 %v1517
        %2320 = vmatpush1.bf16.msra.mxu0 %v1516
        %2321 = vmatprep.subr.bf16.mxu0 %v1521
        %2322 = vmatpush1.bf16.msra.mxu0 %v1520
        %2323 = vmatprep.subr.bf16.mxu0 %v1525
        %2324 = vmatpush1.bf16.msra.mxu0 %v1524
        %2325 = vmatprep.subr.bf16.mxu0 %v1529
        %2326 = vmatpush1.bf16.msra.mxu0 %v1528
        %2327 = vmatprep.subr.bf16.mxu0 %v1533
        %2328 = vmatpush1.bf16.msra.mxu0 %v1532
        %2329 = vmatprep.subr.bf16.mxu0 %v1537
        %2330 = vmatpush1.bf16.msra.mxu0 %v1536
        %2331 = vmatprep.subr.bf16.mxu0 %v1541
        %2332 = vmatpush1.bf16.msra.mxu0 %v1540
        %2333 = vmatprep.subr.bf16.mxu0 %v1545
        %2334 = vmatpush1.bf16.msra.mxu0 %v1544
        %2335 = vmatprep.mubr.bf16.mxu0 %v687
        %2336 = vmatmul.mubr.bf16.gmra.mrb[0].mxu0 %v686
        %v2337 = vpop.f32.mrb[0].mxu0
        %v2338 = vadd.f32 %v2225, %v2337
        %v2339 = vpop.f32.mrb[0].mxu0
        %v2340 = vadd.f32 %v2227, %v2339
        %v2341 = vpop.f32.mrb[0].mxu0
        %v2342 = vadd.f32 %v2229, %v2341
        %v2343 = vpop.f32.mrb[0].mxu0
        %v2344 = vadd.f32 %v2231, %v2343
        %2345 = vmatprep.mubr.bf16.mxu0 %v693
        %2346 = vmatmul.mubr.bf16.gmra.mrb[0].mxu0 %v692
        %v2347 = vpop.f32.mrb[0].mxu0
        %v2348 = vadd.f32 %v2235, %v2347
        %v2349 = vpop.f32.mrb[0].mxu0
        %v2350 = vadd.f32 %v2237, %v2349
        %v2351 = vpop.f32.mrb[0].mxu0
        %v2352 = vadd.f32 %v2239, %v2351
        %v2353 = vpop.f32.mrb[0].mxu0
        %v2354 = vadd.f32 %v2241, %v2353
        %2355 = vmatprep.mubr.bf16.mxu0 %v699
        %2356 = vmatmul.mubr.bf16.gmra.mrb[0].mxu0 %v698
        %v2357 = vpop.f32.mrb[0].mxu0
        %v2358 = vadd.f32 %v2245, %v2357
        %v2359 = vpop.f32.mrb[0].mxu0
        %v2360 = vadd.f32 %v2247, %v2359
        %v2361 = vpop.f32.mrb[0].mxu0
        %v2362 = vadd.f32 %v2249, %v2361
        %v2363 = vpop.f32.mrb[0].mxu0
        %v2364 = vadd.f32 %v2251, %v2363
        %2365 = vmatprep.mubr.bf16.mxu0 %v705
        %2366 = vmatmul.mubr.bf16.gmra.mrb[0].mxu0 %v704
        %v2367 = vpop.f32.mrb[0].mxu0
        %v2368 = vadd.f32 %v2255, %v2367
        %v2369 = vpop.f32.mrb[0].mxu0
        %v2370 = vadd.f32 %v2257, %v2369
        %v2371 = vpop.f32.mrb[0].mxu0
        %v2372 = vadd.f32 %v2259, %v2371
        %v2373 = vpop.f32.mrb[0].mxu0
        %v2374 = vadd.f32 %v2261, %v2373
        %2375 = vmatprep.mubr.bf16.mxu0 %v711
        %2376 = vmatmul.mubr.bf16.gmra.mrb[0].mxu0 %v710
        %v2377 = vpop.f32.mrb[0].mxu0
        %v2378 = vadd.f32 %v2265, %v2377
        %v2379 = vpop.f32.mrb[0].mxu0
        %v2380 = vadd.f32 %v2267, %v2379
        %v2381 = vpop.f32.mrb[0].mxu0
        %v2382 = vadd.f32 %v2269, %v2381
        %v2383 = vpop.f32.mrb[0].mxu0
        %v2384 = vadd.f32 %v2271, %v2383
        %2385 = vmatprep.mubr.bf16.mxu0 %v717
        %2386 = vmatmul.mubr.bf16.gmra.mrb[0].mxu0 %v716
        %v2387 = vpop.f32.mrb[0].mxu0
        %v2388 = vadd.f32 %v2275, %v2387
        %v2389 = vpop.f32.mrb[0].mxu0
        %v2390 = vadd.f32 %v2277, %v2389
        %v2391 = vpop.f32.mrb[0].mxu0
        %v2392 = vadd.f32 %v2279, %v2391
        %v2393 = vpop.f32.mrb[0].mxu0
        %v2394 = vadd.f32 %v2281, %v2393
        %2395 = vmatprep.mubr.bf16.mxu0 %v723
        %2396 = vmatmul.mubr.bf16.gmra.mrb[0].mxu0 %v722
        %v2397 = vpop.f32.mrb[0].mxu0
        %v2398 = vadd.f32 %v2285, %v2397
        %v2399 = vpop.f32.mrb[0].mxu0
        %v2400 = vadd.f32 %v2287, %v2399
        %v2401 = vpop.f32.mrb[0].mxu0
        %v2402 = vadd.f32 %v2289, %v2401
        %v2403 = vpop.f32.mrb[0].mxu0
        %v2404 = vadd.f32 %v2291, %v2403
        %2405 = vmatprep.mubr.bf16.mxu0 %v729
        %2406 = vmatmul.mubr.bf16.gmra.mrb[0].mxu0 %v728
        %v2407 = vpop.f32.mrb[0].mxu0
        %v2408 = vadd.f32 %v2295, %v2407
        %v2409 = vpop.f32.mrb[0].mxu0
        %v2410 = vadd.f32 %v2297, %v2409
        %v2411 = vpop.f32.mrb[0].mxu0
        %v2412 = vadd.f32 %v2299, %v2411
        %v2413 = vpop.f32.mrb[0].mxu0
        %v2414 = vadd.f32 %v2301, %v2413
        %2415 = vdwg.mxu0
        %v2416 = vmax.f32 %v1999, 0.0
        %v2417 = vmax.f32 %v2001, 0.0
        %v2418 = vmax.f32 %v2338, 0.0
        %v2419 = vmax.f32 %v2340, 0.0
        %v2420 = vmax.f32 %v2003, 0.0
        %v2421 = vmax.f32 %v2005, 0.0
        %v2422 = vmax.f32 %v2342, 0.0
        %v2423 = vmax.f32 %v2344, 0.0
        %v2424 = vmax.f32 %v2009, 0.0
        %v2425 = vmax.f32 %v2011, 0.0
        %v2426 = vmax.f32 %v2348, 0.0
        %v2427 = vmax.f32 %v2350, 0.0
        %v2428 = vmax.f32 %v2013, 0.0
        %v2429 = vmax.f32 %v2015, 0.0
        %v2430 = vmax.f32 %v2352, 0.0
        %v2431 = vmax.f32 %v2354, 0.0
        %v2432 = vmax.f32 %v2019, 0.0
        %v2433 = vmax.f32 %v2021, 0.0
        %v2434 = vmax.f32 %v2358, 0.0
        %v2435 = vmax.f32 %v2360, 0.0
        %v2436 = vmax.f32 %v2023, 0.0
        %v2437 = vmax.f32 %v2025, 0.0
        %v2438 = vmax.f32 %v2362, 0.0
        %v2439 = vmax.f32 %v2364, 0.0
        %v2440 = vmax.f32 %v2029, 0.0
        %v2441 = vmax.f32 %v2031, 0.0
        %v2442 = vmax.f32 %v2368, 0.0
        %v2443 = vmax.f32 %v2370, 0.0
        %v2444 = vmax.f32 %v2033, 0.0
        %v2445 = vmax.f32 %v2035, 0.0
        %v2446 = vmax.f32 %v2372, 0.0
        %v2447 = vmax.f32 %v2374, 0.0
        %v2448 = vmax.f32 %v2039, 0.0
        %v2449 = vmax.f32 %v2041, 0.0
        %v2450 = vmax.f32 %v2378, 0.0
        %v2451 = vmax.f32 %v2380, 0.0
        %v2452 = vmax.f32 %v2043, 0.0
        %v2453 = vmax.f32 %v2045, 0.0
        %v2454 = vmax.f32 %v2382, 0.0
        %v2455 = vmax.f32 %v2384, 0.0
        %v2456 = vmax.f32 %v2049, 0.0
        %v2457 = vmax.f32 %v2051, 0.0
        %v2458 = vmax.f32 %v2388, 0.0
        %v2459 = vmax.f32 %v2390, 0.0
        %v2460 = vmax.f32 %v2053, 0.0
        %v2461 = vmax.f32 %v2055, 0.0
        %v2462 = vmax.f32 %v2392, 0.0
        %v2463 = vmax.f32 %v2394, 0.0
        %v2464 = vmax.f32 %v2059, 0.0
        %v2465 = vmax.f32 %v2061, 0.0
        %v2466 = vmax.f32 %v2398, 0.0
        %v2467 = vmax.f32 %v2400, 0.0
        %v2468 = vmax.f32 %v2063, 0.0
        %v2469 = vmax.f32 %v2065, 0.0
        %v2470 = vmax.f32 %v2402, 0.0
        %v2471 = vmax.f32 %v2404, 0.0
        %v2472 = vmax.f32 %v2069, 0.0
        %v2473 = vmax.f32 %v2071, 0.0
        %v2474 = vmax.f32 %v2408, 0.0
        %v2475 = vmax.f32 %v2410, 0.0
        %v2476 = vmax.f32 %v2073, 0.0
        %v2477 = vmax.f32 %v2075, 0.0
        %v2478 = vmax.f32 %v2412, 0.0
        %v2479 = vmax.f32 %v2414, 0.0
        %v2480 = vpack.c.bf16 %v2420, %v2416
        %v2481 = vpack.c.bf16 %v2421, %v2417
        %v2482 = vpack.c.bf16 %v2422, %v2418
        %v2483 = vpack.c.bf16 %v2423, %v2419
        %v2484 = vpack.c.bf16 %v2428, %v2424
        %v2485 = vpack.c.bf16 %v2429, %v2425
        %v2486 = vpack.c.bf16 %v2430, %v2426
        %v2487 = vpack.c.bf16 %v2431, %v2427
        %v2488 = vpack.c.bf16 %v2436, %v2432
        %v2489 = vpack.c.bf16 %v2437, %v2433
        %v2490 = vpack.c.bf16 %v2438, %v2434
        %v2491 = vpack.c.bf16 %v2439, %v2435
        %v2492 = vpack.c.bf16 %v2444, %v2440
        %v2493 = vpack.c.bf16 %v2445, %v2441
        %v2494 = vpack.c.bf16 %v2446, %v2442
        %v2495 = vpack.c.bf16 %v2447, %v2443
        %v2496 = vpack.c.bf16 %v2452, %v2448
        %v2497 = vpack.c.bf16 %v2453, %v2449
        %v2498 = vpack.c.bf16 %v2454, %v2450
        %v2499 = vpack.c.bf16 %v2455, %v2451
        %v2500 = vpack.c.bf16 %v2460, %v2456
        %v2501 = vpack.c.bf16 %v2461, %v2457
        %v2502 = vpack.c.bf16 %v2462, %v2458
        %v2503 = vpack.c.bf16 %v2463, %v2459
        %v2504 = vpack.c.bf16 %v2468, %v2464
        %v2505 = vpack.c.bf16 %v2469, %v2465
        %v2506 = vpack.c.bf16 %v2470, %v2466
        %v2507 = vpack.c.bf16 %v2471, %v2467
        %v2508 = vpack.c.bf16 %v2476, %v2472
        %v2509 = vpack.c.bf16 %v2477, %v2473
        %v2510 = vpack.c.bf16 %v2478, %v2474
        %v2511 = vpack.c.bf16 %v2479, %v2475
        %v2512 = vld [vmem:[#allocation7] sm:$0xf]
        %v2513 = vld [vmem:[#allocation7 + $0x4] sm:$0xf]
        %v2514 = vld [vmem:[#allocation7 + $0x8] sm:$0xf]
        %v2515 = vld [vmem:[#allocation7 + $0xc] sm:$0xf]
        %v2516 = vld [vmem:[#allocation7 + $0x10] sm:$0xf]
        %v2517 = vld [vmem:[#allocation7 + $0x14] sm:$0xf]
        %v2518 = vld [vmem:[#allocation7 + $0x18] sm:$0xf]
        %v2519 = vld [vmem:[#allocation7 + $0x1c] sm:$0xf]
        %v2520 = vld [vmem:[#allocation7 + $0x20] sm:$0xf]
        %v2521 = vld [vmem:[#allocation7 + $0x24] sm:$0xf]
        %v2522 = vld [vmem:[#allocation7 + $0x28] sm:$0xf]
        %v2523 = vld [vmem:[#allocation7 + $0x2c] sm:$0xf]
        %v2524 = vld [vmem:[#allocation7 + $0x30] sm:$0xf]
        %v2525 = vld [vmem:[#allocation7 + $0x34] sm:$0xf]
        %v2526 = vld [vmem:[#allocation7 + $0x38] sm:$0xf]
        %v2527 = vld [vmem:[#allocation7 + $0x3c] sm:$0xf]
        %v2528 = vld [vmem:[#allocation7 + $0x40] sm:$0xf]
        %v2529 = vld [vmem:[#allocation7 + $0x44] sm:$0xf]
        %v2530 = vld [vmem:[#allocation7 + $0x48] sm:$0xf]
        %v2531 = vld [vmem:[#allocation7 + $0x4c] sm:$0xf]
        %v2532 = vld [vmem:[#allocation7 + $0x50] sm:$0xf]
        %v2533 = vld [vmem:[#allocation7 + $0x54] sm:$0xf]
        %v2534 = vld [vmem:[#allocation7 + $0x58] sm:$0xf]
        %v2535 = vld [vmem:[#allocation7 + $0x5c] sm:$0xf]
        %v2536 = vld [vmem:[#allocation7 + $0x60] sm:$0xf]
        %v2537 = vld [vmem:[#allocation7 + $0x64] sm:$0xf]
        %v2538 = vld [vmem:[#allocation7 + $0x68] sm:$0xf]
        %v2539 = vld [vmem:[#allocation7 + $0x6c] sm:$0xf]
        %v2540 = vld [vmem:[#allocation7 + $0x70] sm:$0xf]
        %v2541 = vld [vmem:[#allocation7 + $0x74] sm:$0xf]
        %v2542 = vld [vmem:[#allocation7 + $0x78] sm:$0xf]
        %v2543 = vld [vmem:[#allocation7 + $0x7c] sm:$0xf]
        %v2544 = vld [vmem:[#allocation7 + $0x80] sm:$0xf]
        %v2545 = vld [vmem:[#allocation7 + $0x84] sm:$0xf]
        %v2546 = vld [vmem:[#allocation7 + $0x88] sm:$0xf]
        %v2547 = vld [vmem:[#allocation7 + $0x8c] sm:$0xf]
        %v2548 = vld [vmem:[#allocation7 + $0x90] sm:$0xf]
        %v2549 = vld [vmem:[#allocation7 + $0x94] sm:$0xf]
        %v2550 = vld [vmem:[#allocation7 + $0x98] sm:$0xf]
        %v2551 = vld [vmem:[#allocation7 + $0x9c] sm:$0xf]
        %v2552 = vld [vmem:[#allocation7 + $0xa0] sm:$0xf]
        %v2553 = vld [vmem:[#allocation7 + $0xa4] sm:$0xf]
        %v2554 = vld [vmem:[#allocation7 + $0xa8] sm:$0xf]
        %v2555 = vld [vmem:[#allocation7 + $0xac] sm:$0xf]
        %v2556 = vld [vmem:[#allocation7 + $0xb0] sm:$0xf]
        %v2557 = vld [vmem:[#allocation7 + $0xb4] sm:$0xf]
        %v2558 = vld [vmem:[#allocation7 + $0xb8] sm:$0xf]
        %v2559 = vld [vmem:[#allocation7 + $0xbc] sm:$0xf]
        %v2560 = vld [vmem:[#allocation7 + $0xc0] sm:$0xf]
        %v2561 = vld [vmem:[#allocation7 + $0xc4] sm:$0xf]
        %v2562 = vld [vmem:[#allocation7 + $0xc8] sm:$0xf]
        %v2563 = vld [vmem:[#allocation7 + $0xcc] sm:$0xf]
        %v2564 = vld [vmem:[#allocation7 + $0xd0] sm:$0xf]
        %v2565 = vld [vmem:[#allocation7 + $0xd4] sm:$0xf]
        %v2566 = vld [vmem:[#allocation7 + $0xd8] sm:$0xf]
        %v2567 = vld [vmem:[#allocation7 + $0xdc] sm:$0xf]
        %v2568 = vld [vmem:[#allocation7 + $0xe0] sm:$0xf]
        %v2569 = vld [vmem:[#allocation7 + $0xe4] sm:$0xf]
        %v2570 = vld [vmem:[#allocation7 + $0xe8] sm:$0xf]
        %v2571 = vld [vmem:[#allocation7 + $0xec] sm:$0xf]
        %v2572 = vld [vmem:[#allocation7 + $0xf0] sm:$0xf]
        %v2573 = vld [vmem:[#allocation7 + $0xf4] sm:$0xf]
        %v2574 = vld [vmem:[#allocation7 + $0xf8] sm:$0xf]
        %v2575 = vld [vmem:[#allocation7 + $0xfc] sm:$0xf]
        %v2576 = vld [vmem:[%s4] sm:$0x1]
        %v2578 = vlaneseq
        %v2579 = vshrl.u32 %v2578, 7
        %v2580 = vsub.s32 0, %v2579
        %v2581 = vrot.slane %v2576, %v2580
        %v2647 = vunpack.c.l.b16 %v2512
        %v2648 = vunpack.c.l.b16 %v2513
        %v2649 = vunpack.c.l.b16 %v2514
        %v2650 = vunpack.c.l.b16 %v2515
        %v2651 = vunpack.c.l.b16 %v2516
        %v2652 = vunpack.c.l.b16 %v2517
        %v2653 = vunpack.c.l.b16 %v2518
        %v2654 = vunpack.c.l.b16 %v2519
        %v2655 = vunpack.c.l.b16 %v2520
        %v2656 = vunpack.c.l.b16 %v2521
        %v2657 = vunpack.c.l.b16 %v2522
        %v2658 = vunpack.c.l.b16 %v2523
        %v2659 = vunpack.c.l.b16 %v2524
        %v2660 = vunpack.c.l.b16 %v2525
        %v2661 = vunpack.c.l.b16 %v2526
        %v2662 = vunpack.c.l.b16 %v2527
        %v2663 = vunpack.c.l.b16 %v2528
        %v2664 = vunpack.c.l.b16 %v2529
        %v2665 = vunpack.c.l.b16 %v2530
        %v2666 = vunpack.c.l.b16 %v2531
        %v2667 = vunpack.c.l.b16 %v2532
        %v2668 = vunpack.c.l.b16 %v2533
        %v2669 = vunpack.c.l.b16 %v2534
        %v2670 = vunpack.c.l.b16 %v2535
        %v2671 = vunpack.c.l.b16 %v2536
        %v2672 = vunpack.c.l.b16 %v2537
        %v2673 = vunpack.c.l.b16 %v2538
        %v2674 = vunpack.c.l.b16 %v2539
        %v2675 = vunpack.c.l.b16 %v2540
        %v2676 = vunpack.c.l.b16 %v2541
        %v2677 = vunpack.c.l.b16 %v2542
        %v2678 = vunpack.c.l.b16 %v2543
        %v2679 = vunpack.c.l.b16 %v2544
        %v2680 = vunpack.c.l.b16 %v2545
        %v2681 = vunpack.c.l.b16 %v2546
        %v2682 = vunpack.c.l.b16 %v2547
        %v2683 = vunpack.c.l.b16 %v2548
        %v2684 = vunpack.c.l.b16 %v2549
        %v2685 = vunpack.c.l.b16 %v2550
        %v2686 = vunpack.c.l.b16 %v2551
        %v2687 = vunpack.c.l.b16 %v2552
        %v2688 = vunpack.c.l.b16 %v2553
        %v2689 = vunpack.c.l.b16 %v2554
        %v2690 = vunpack.c.l.b16 %v2555
        %v2691 = vunpack.c.l.b16 %v2556
        %v2692 = vunpack.c.l.b16 %v2557
        %v2693 = vunpack.c.l.b16 %v2558
        %v2694 = vunpack.c.l.b16 %v2559
        %v2695 = vunpack.c.l.b16 %v2560
        %v2696 = vunpack.c.l.b16 %v2561
        %v2697 = vunpack.c.l.b16 %v2562
        %v2698 = vunpack.c.l.b16 %v2563
        %v2699 = vunpack.c.l.b16 %v2564
        %v2700 = vunpack.c.l.b16 %v2565
        %v2701 = vunpack.c.l.b16 %v2566
        %v2702 = vunpack.c.l.b16 %v2567
        %v2703 = vunpack.c.l.b16 %v2568
        %v2704 = vunpack.c.l.b16 %v2569
        %v2705 = vunpack.c.l.b16 %v2570
        %v2706 = vunpack.c.l.b16 %v2571
        %v2707 = vunpack.c.l.b16 %v2572
        %v2708 = vunpack.c.l.b16 %v2573
        %v2709 = vunpack.c.l.b16 %v2574
        %v2710 = vunpack.c.l.b16 %v2575
        %v2711 = vpack.c.b16 %v2648, %v2647
        %v2712 = vpack.c.b16 %v2650, %v2649
        %v2713 = vpack.c.b16 %v2652, %v2651
        %v2714 = vpack.c.b16 %v2654, %v2653
        %v2715 = vpack.c.b16 %v2656, %v2655
        %v2716 = vpack.c.b16 %v2658, %v2657
        %v2717 = vpack.c.b16 %v2660, %v2659
        %v2718 = vpack.c.b16 %v2662, %v2661
        %v2719 = vpack.c.b16 %v2664, %v2663
        %v2720 = vpack.c.b16 %v2666, %v2665
        %v2721 = vpack.c.b16 %v2668, %v2667
        %v2722 = vpack.c.b16 %v2670, %v2669
        %v2723 = vpack.c.b16 %v2672, %v2671
        %v2724 = vpack.c.b16 %v2674, %v2673
        %v2725 = vpack.c.b16 %v2676, %v2675
        %v2726 = vpack.c.b16 %v2678, %v2677
        %v2727 = vpack.c.b16 %v2680, %v2679
        %v2728 = vpack.c.b16 %v2682, %v2681
        %v2729 = vpack.c.b16 %v2684, %v2683
        %v2730 = vpack.c.b16 %v2686, %v2685
        %v2731 = vpack.c.b16 %v2688, %v2687
        %v2732 = vpack.c.b16 %v2690, %v2689
        %v2733 = vpack.c.b16 %v2692, %v2691
        %v2734 = vpack.c.b16 %v2694, %v2693
        %v2735 = vpack.c.b16 %v2696, %v2695
        %v2736 = vpack.c.b16 %v2698, %v2697
        %v2737 = vpack.c.b16 %v2700, %v2699
        %v2738 = vpack.c.b16 %v2702, %v2701
        %v2739 = vpack.c.b16 %v2704, %v2703
        %v2740 = vpack.c.b16 %v2706, %v2705
        %v2741 = vpack.c.b16 %v2708, %v2707
        %v2742 = vpack.c.b16 %v2710, %v2709
        %2775 = vmatprep.subr.bf16.mxu0 0
        %2776 = vmatpush1.bf16.msra.mxu0 %v2711
        %2777 = vmatprep.subr.bf16.mxu0 0
        %2778 = vmatpush1.bf16.msra.mxu0 %v2712
        %2779 = vmatprep.subr.bf16.mxu0 0
        %2780 = vmatpush1.bf16.msra.mxu0 %v2713
        %2781 = vmatprep.subr.bf16.mxu0 0
        %2782 = vmatpush1.bf16.msra.mxu0 %v2714
        %2783 = vmatprep.subr.bf16.mxu0 0
        %2784 = vmatpush1.bf16.msra.mxu0 %v2715
        %2785 = vmatprep.subr.bf16.mxu0 0
        %2786 = vmatpush1.bf16.msra.mxu0 %v2716
        %2787 = vmatprep.subr.bf16.mxu0 0
        %2788 = vmatpush1.bf16.msra.mxu0 %v2717
        %2789 = vmatprep.subr.bf16.mxu0 0
        %2790 = vmatpush1.bf16.msra.mxu0 %v2718
        %2791 = vmatprep.subr.bf16.mxu0 0
        %2792 = vmatpush1.bf16.msra.mxu0 %v2719
        %2793 = vmatprep.subr.bf16.mxu0 0
        %2794 = vmatpush1.bf16.msra.mxu0 %v2720
        %2795 = vmatprep.subr.bf16.mxu0 0
        %2796 = vmatpush1.bf16.msra.mxu0 %v2721
        %2797 = vmatprep.subr.bf16.mxu0 0
        %2798 = vmatpush1.bf16.msra.mxu0 %v2722
        %2799 = vmatprep.subr.bf16.mxu0 0
        %2800 = vmatpush1.bf16.msra.mxu0 %v2723
        %2801 = vmatprep.subr.bf16.mxu0 0
        %2802 = vmatpush1.bf16.msra.mxu0 %v2724
        %2803 = vmatprep.subr.bf16.mxu0 0
        %2804 = vmatpush1.bf16.msra.mxu0 %v2725
        %2805 = vmatprep.subr.bf16.mxu0 0
        %2806 = vmatpush1.bf16.msra.mxu0 %v2726
        %2807 = vmatprep.mubr.bf16.mxu0 %v2481
        %2808 = vmatmul.mubr.bf16.gmra.mrb[0].mxu0 %v2480
        %v2809 = vpop.f32.mrb[0].mxu0
        %v2810 = vadd.f32 %v2581, %v2809
        %v2811 = vpop.f32.mrb[0].mxu0
        %v2812 = vpop.f32.mrb[0].mxu0
        %v2813 = vadd.f32 %v2581, %v2812
        %v2814 = vpop.f32.mrb[0].mxu0
        %2815 = vmatprep.mubr.bf16.mxu0 %v2485
        %2816 = vmatmul.mubr.bf16.gmra.mrb[0].mxu0 %v2484
        %v2817 = vpop.f32.mrb[0].mxu0
        %v2818 = vadd.f32 %v2581, %v2817
        %v2819 = vpop.f32.mrb[0].mxu0
        %v2820 = vpop.f32.mrb[0].mxu0
        %v2821 = vadd.f32 %v2581, %v2820
        %v2822 = vpop.f32.mrb[0].mxu0
        %2823 = vmatprep.mubr.bf16.mxu0 %v2489
        %2824 = vmatmul.mubr.bf16.gmra.mrb[0].mxu0 %v2488
        %v2825 = vpop.f32.mrb[0].mxu0
        %v2826 = vadd.f32 %v2581, %v2825
        %v2827 = vpop.f32.mrb[0].mxu0
        %v2828 = vpop.f32.mrb[0].mxu0
        %v2829 = vadd.f32 %v2581, %v2828
        %v2830 = vpop.f32.mrb[0].mxu0
        %2831 = vmatprep.mubr.bf16.mxu0 %v2493
        %2832 = vmatmul.mubr.bf16.gmra.mrb[0].mxu0 %v2492
        %v2833 = vpop.f32.mrb[0].mxu0
        %v2834 = vadd.f32 %v2581, %v2833
        %v2835 = vpop.f32.mrb[0].mxu0
        %v2836 = vpop.f32.mrb[0].mxu0
        %v2837 = vadd.f32 %v2581, %v2836
        %v2838 = vpop.f32.mrb[0].mxu0
        %2839 = vmatprep.mubr.bf16.mxu0 %v2497
        %2840 = vmatmul.mubr.bf16.gmra.mrb[0].mxu0 %v2496
        %v2841 = vpop.f32.mrb[0].mxu0
        %v2842 = vadd.f32 %v2581, %v2841
        %v2843 = vpop.f32.mrb[0].mxu0
        %v2844 = vpop.f32.mrb[0].mxu0
        %v2845 = vadd.f32 %v2581, %v2844
        %v2846 = vpop.f32.mrb[0].mxu0
        %2847 = vmatprep.mubr.bf16.mxu0 %v2501
        %2848 = vmatmul.mubr.bf16.gmra.mrb[0].mxu0 %v2500
        %v2849 = vpop.f32.mrb[0].mxu0
        %v2850 = vadd.f32 %v2581, %v2849
        %v2851 = vpop.f32.mrb[0].mxu0
        %v2852 = vpop.f32.mrb[0].mxu0
        %v2853 = vadd.f32 %v2581, %v2852
        %v2854 = vpop.f32.mrb[0].mxu0
        %2855 = vmatprep.mubr.bf16.mxu0 %v2505
        %2856 = vmatmul.mubr.bf16.gmra.mrb[0].mxu0 %v2504
        %v2857 = vpop.f32.mrb[0].mxu0
        %v2858 = vadd.f32 %v2581, %v2857
        %v2859 = vpop.f32.mrb[0].mxu0
        %v2860 = vpop.f32.mrb[0].mxu0
        %v2861 = vadd.f32 %v2581, %v2860
        %v2862 = vpop.f32.mrb[0].mxu0
        %2863 = vmatprep.mubr.bf16.mxu0 %v2509
        %2864 = vmatmul.mubr.bf16.gmra.mrb[0].mxu0 %v2508
        %v2865 = vpop.f32.mrb[0].mxu0
        %v2866 = vadd.f32 %v2581, %v2865
        %v2867 = vpop.f32.mrb[0].mxu0
        %v2868 = vpop.f32.mrb[0].mxu0
        %v2869 = vadd.f32 %v2581, %v2868
        %v2870 = vpop.f32.mrb[0].mxu0
        %2871 = vdwg.mxu0
        %2872 = vmatprep.subr.bf16.mxu0 0
        %2873 = vmatpush1.bf16.msra.mxu0 %v2727
        %2874 = vmatprep.subr.bf16.mxu0 0
        %2875 = vmatpush1.bf16.msra.mxu0 %v2728
        %2876 = vmatprep.subr.bf16.mxu0 0
        %2877 = vmatpush1.bf16.msra.mxu0 %v2729
        %2878 = vmatprep.subr.bf16.mxu0 0
        %2879 = vmatpush1.bf16.msra.mxu0 %v2730
        %2880 = vmatprep.subr.bf16.mxu0 0
        %2881 = vmatpush1.bf16.msra.mxu0 %v2731
        %2882 = vmatprep.subr.bf16.mxu0 0
        %2883 = vmatpush1.bf16.msra.mxu0 %v2732
        %2884 = vmatprep.subr.bf16.mxu0 0
        %2885 = vmatpush1.bf16.msra.mxu0 %v2733
        %2886 = vmatprep.subr.bf16.mxu0 0
        %2887 = vmatpush1.bf16.msra.mxu0 %v2734
        %2888 = vmatprep.subr.bf16.mxu0 0
        %2889 = vmatpush1.bf16.msra.mxu0 %v2735
        %2890 = vmatprep.subr.bf16.mxu0 0
        %2891 = vmatpush1.bf16.msra.mxu0 %v2736
        %2892 = vmatprep.subr.bf16.mxu0 0
        %2893 = vmatpush1.bf16.msra.mxu0 %v2737
        %2894 = vmatprep.subr.bf16.mxu0 0
        %2895 = vmatpush1.bf16.msra.mxu0 %v2738
        %2896 = vmatprep.subr.bf16.mxu0 0
        %2897 = vmatpush1.bf16.msra.mxu0 %v2739
        %2898 = vmatprep.subr.bf16.mxu0 0
        %2899 = vmatpush1.bf16.msra.mxu0 %v2740
        %2900 = vmatprep.subr.bf16.mxu0 0
        %2901 = vmatpush1.bf16.msra.mxu0 %v2741
        %2902 = vmatprep.subr.bf16.mxu0 0
        %2903 = vmatpush1.bf16.msra.mxu0 %v2742
        %2904 = vmatprep.mubr.bf16.mxu0 %v2483
        %2905 = vmatmul.mubr.bf16.gmra.mrb[0].mxu0 %v2482
        %v2906 = vpop.f32.mrb[0].mxu0
        %v2907 = vadd.f32 %v2810, %v2906
        %v2908 = vpop.f32.mrb[0].mxu0
        %v2909 = vpop.f32.mrb[0].mxu0
        %v2910 = vadd.f32 %v2813, %v2909
        %v2911 = vpop.f32.mrb[0].mxu0
        %2912 = vmatprep.mubr.bf16.mxu0 %v2487
        %2913 = vmatmul.mubr.bf16.gmra.mrb[0].mxu0 %v2486
        %v2914 = vpop.f32.mrb[0].mxu0
        %v2915 = vadd.f32 %v2818, %v2914
        %v2916 = vpop.f32.mrb[0].mxu0
        %v2917 = vpop.f32.mrb[0].mxu0
        %v2918 = vadd.f32 %v2821, %v2917
        %v2919 = vpop.f32.mrb[0].mxu0
        %2920 = vmatprep.mubr.bf16.mxu0 %v2491
        %2921 = vmatmul.mubr.bf16.gmra.mrb[0].mxu0 %v2490
        %v2922 = vpop.f32.mrb[0].mxu0
        %v2923 = vadd.f32 %v2826, %v2922
        %v2924 = vpop.f32.mrb[0].mxu0
        %v2925 = vpop.f32.mrb[0].mxu0
        %v2926 = vadd.f32 %v2829, %v2925
        %v2927 = vpop.f32.mrb[0].mxu0
        %2928 = vmatprep.mubr.bf16.mxu0 %v2495
        %2929 = vmatmul.mubr.bf16.gmra.mrb[0].mxu0 %v2494
        %v2930 = vpop.f32.mrb[0].mxu0
        %v2931 = vadd.f32 %v2834, %v2930
        %v2932 = vpop.f32.mrb[0].mxu0
        %v2933 = vpop.f32.mrb[0].mxu0
        %v2934 = vadd.f32 %v2837, %v2933
        %v2935 = vpop.f32.mrb[0].mxu0
        %2936 = vmatprep.mubr.bf16.mxu0 %v2499
        %2937 = vmatmul.mubr.bf16.gmra.mrb[0].mxu0 %v2498
        %v2938 = vpop.f32.mrb[0].mxu0
        %v2939 = vadd.f32 %v2842, %v2938
        %v2940 = vpop.f32.mrb[0].mxu0
        %v2941 = vpop.f32.mrb[0].mxu0
        %v2942 = vadd.f32 %v2845, %v2941
        %v2943 = vpop.f32.mrb[0].mxu0
        %2944 = vmatprep.mubr.bf16.mxu0 %v2503
        %2945 = vmatmul.mubr.bf16.gmra.mrb[0].mxu0 %v2502
        %v2946 = vpop.f32.mrb[0].mxu0
        %v2947 = vadd.f32 %v2850, %v2946
        %v2948 = vpop.f32.mrb[0].mxu0
        %v2949 = vpop.f32.mrb[0].mxu0
        %v2950 = vadd.f32 %v2853, %v2949
        %v2951 = vpop.f32.mrb[0].mxu0
        %2952 = vmatprep.mubr.bf16.mxu0 %v2507
        %2953 = vmatmul.mubr.bf16.gmra.mrb[0].mxu0 %v2506
        %v2954 = vpop.f32.mrb[0].mxu0
        %v2955 = vadd.f32 %v2858, %v2954
        %v2956 = vpop.f32.mrb[0].mxu0
        %v2957 = vpop.f32.mrb[0].mxu0
        %v2958 = vadd.f32 %v2861, %v2957
        %v2959 = vpop.f32.mrb[0].mxu0
        %2960 = vmatprep.mubr.bf16.mxu0 %v2511
        %2961 = vmatmul.mubr.bf16.gmra.mrb[0].mxu0 %v2510
        %v2962 = vpop.f32.mrb[0].mxu0
        %v2963 = vadd.f32 %v2866, %v2962
        %v2964 = vpop.f32.mrb[0].mxu0
        %v2965 = vpop.f32.mrb[0].mxu0
        %v2966 = vadd.f32 %v2869, %v2965
        %v2967 = vpop.f32.mrb[0].mxu0
        %2968 = vdwg.mxu0
        %2969 = vmax.xlane.f32.xlu0 %v2907
        %v2970 = vpop.xlane.xlu0 %2969
        %2971 = vmax.xlane.f32.xlu0 %v2910
        %v2972 = vpop.xlane.xlu0 %2971
        %2973 = vmax.xlane.f32.xlu0 %v2915
        %v2974 = vpop.xlane.xlu0 %2973
        %2975 = vmax.xlane.f32.xlu0 %v2918
        %v2976 = vpop.xlane.xlu0 %2975
        %2977 = vmax.xlane.f32.xlu0 %v2923
        %v2978 = vpop.xlane.xlu0 %2977
        %2979 = vmax.xlane.f32.xlu0 %v2926
        %v2980 = vpop.xlane.xlu0 %2979
        %2981 = vmax.xlane.f32.xlu0 %v2931
        %v2982 = vpop.xlane.xlu0 %2981
        %2983 = vmax.xlane.f32.xlu0 %v2934
        %v2984 = vpop.xlane.xlu0 %2983
        %2985 = vmax.xlane.f32.xlu0 %v2939
        %v2986 = vpop.xlane.xlu0 %2985
        %2987 = vmax.xlane.f32.xlu0 %v2942
        %v2988 = vpop.xlane.xlu0 %2987
        %2989 = vmax.xlane.f32.xlu0 %v2947
        %v2990 = vpop.xlane.xlu0 %2989
        %2991 = vmax.xlane.f32.xlu0 %v2950
        %v2992 = vpop.xlane.xlu0 %2991
        %2993 = vmax.xlane.f32.xlu0 %v2955
        %v2994 = vpop.xlane.xlu0 %2993
        %2995 = vmax.xlane.f32.xlu0 %v2958
        %v2996 = vpop.xlane.xlu0 %2995
        %2997 = vmax.xlane.f32.xlu0 %v2963
        %v2998 = vpop.xlane.xlu0 %2997
        %2999 = vmax.xlane.f32.xlu0 %v2966
        %v3000 = vpop.xlane.xlu0 %2999
        %v3001 = vsub.f32 %v2907, %v2970
        %v3002 = vsub.f32 %v2910, %v2972
        %v3003 = vsub.f32 %v2915, %v2974
        %v3004 = vsub.f32 %v2918, %v2976
        %v3005 = vsub.f32 %v2923, %v2978
        %v3006 = vsub.f32 %v2926, %v2980
        %v3007 = vsub.f32 %v2931, %v2982
        %v3008 = vsub.f32 %v2934, %v2984
        %v3009 = vsub.f32 %v2939, %v2986
        %v3010 = vsub.f32 %v2942, %v2988
        %v3011 = vsub.f32 %v2947, %v2990
        %v3012 = vsub.f32 %v2950, %v2992
        %v3013 = vsub.f32 %v2955, %v2994
        %v3014 = vsub.f32 %v2958, %v2996
        %v3015 = vsub.f32 %v2963, %v2998
        %v3016 = vsub.f32 %v2966, %v3000
        %v3017 = vmul.f32 %v3001, 1.442695
        %v3018 = vpow.pop %v3017
        %v3019 = vmul.f32 %v3002, 1.442695
        %v3020 = vpow.pop %v3019
        %v3021 = vmul.f32 %v3003, 1.442695
        %v3022 = vpow.pop %v3021
        %v3023 = vmul.f32 %v3004, 1.442695
        %v3024 = vpow.pop %v3023
        %v3025 = vmul.f32 %v3005, 1.442695
        %v3026 = vpow.pop %v3025
        %v3027 = vmul.f32 %v3006, 1.442695
        %v3028 = vpow.pop %v3027
        %v3029 = vmul.f32 %v3007, 1.442695
        %v3030 = vpow.pop %v3029
        %v3031 = vmul.f32 %v3008, 1.442695
        %v3032 = vpow.pop %v3031
        %v3033 = vmul.f32 %v3009, 1.442695
        %v3034 = vpow.pop %v3033
        %v3035 = vmul.f32 %v3010, 1.442695
        %v3036 = vpow.pop %v3035
        %v3037 = vmul.f32 %v3011, 1.442695
        %v3038 = vpow.pop %v3037
        %v3039 = vmul.f32 %v3012, 1.442695
        %v3040 = vpow.pop %v3039
        %v3041 = vmul.f32 %v3013, 1.442695
        %v3042 = vpow.pop %v3041
        %v3043 = vmul.f32 %v3014, 1.442695
        %v3044 = vpow.pop %v3043
        %v3045 = vmul.f32 %v3015, 1.442695
        %v3046 = vpow.pop %v3045
        %v3047 = vmul.f32 %v3016, 1.442695
        %v3048 = vpow.pop %v3047
        %3049 = vadd.xlane.f32.xlu0 %v3018
        %v3050 = vpop.xlane.xlu0 %3049
        %3051 = vadd.xlane.f32.xlu0 %v3020
        %v3052 = vpop.xlane.xlu0 %3051
        %3053 = vadd.xlane.f32.xlu0 %v3022
        %v3054 = vpop.xlane.xlu0 %3053
        %3055 = vadd.xlane.f32.xlu0 %v3024
        %v3056 = vpop.xlane.xlu0 %3055
        %3057 = vadd.xlane.f32.xlu0 %v3026
        %v3058 = vpop.xlane.xlu0 %3057
        %3059 = vadd.xlane.f32.xlu0 %v3028
        %v3060 = vpop.xlane.xlu0 %3059
        %3061 = vadd.xlane.f32.xlu0 %v3030
        %v3062 = vpop.xlane.xlu0 %3061
        %3063 = vadd.xlane.f32.xlu0 %v3032
        %v3064 = vpop.xlane.xlu0 %3063
        %3065 = vadd.xlane.f32.xlu0 %v3034
        %v3066 = vpop.xlane.xlu0 %3065
        %3067 = vadd.xlane.f32.xlu0 %v3036
        %v3068 = vpop.xlane.xlu0 %3067
        %3069 = vadd.xlane.f32.xlu0 %v3038
        %v3070 = vpop.xlane.xlu0 %3069
        %3071 = vadd.xlane.f32.xlu0 %v3040
        %v3072 = vpop.xlane.xlu0 %3071
        %3073 = vadd.xlane.f32.xlu0 %v3042
        %v3074 = vpop.xlane.xlu0 %3073
        %3075 = vadd.xlane.f32.xlu0 %v3044
        %v3076 = vpop.xlane.xlu0 %3075
        %3077 = vadd.xlane.f32.xlu0 %v3046
        %v3078 = vpop.xlane.xlu0 %3077
        %3079 = vadd.xlane.f32.xlu0 %v3048
        %v3080 = vpop.xlane.xlu0 %3079
        %v3081 = vlog2.pop %v3050
        %v3082 = vmul.f32 %v3081, 0.6931472
        %v3083 = vlog2.pop %v3052
        %v3084 = vmul.f32 %v3083, 0.6931472
        %v3085 = vlog2.pop %v3054
        %v3086 = vmul.f32 %v3085, 0.6931472
        %v3087 = vlog2.pop %v3056
        %v3088 = vmul.f32 %v3087, 0.6931472
        %v3089 = vlog2.pop %v3058
        %v3090 = vmul.f32 %v3089, 0.6931472
        %v3091 = vlog2.pop %v3060
        %v3092 = vmul.f32 %v3091, 0.6931472
        %v3093 = vlog2.pop %v3062
        %v3094 = vmul.f32 %v3093, 0.6931472
        %v3095 = vlog2.pop %v3064
        %v3096 = vmul.f32 %v3095, 0.6931472
        %v3097 = vlog2.pop %v3066
        %v3098 = vmul.f32 %v3097, 0.6931472
        %v3099 = vlog2.pop %v3068
        %v3100 = vmul.f32 %v3099, 0.6931472
        %v3101 = vlog2.pop %v3070
        %v3102 = vmul.f32 %v3101, 0.6931472
        %v3103 = vlog2.pop %v3072
        %v3104 = vmul.f32 %v3103, 0.6931472
        %v3105 = vlog2.pop %v3074
        %v3106 = vmul.f32 %v3105, 0.6931472
        %v3107 = vlog2.pop %v3076
        %v3108 = vmul.f32 %v3107, 0.6931472
        %v3109 = vlog2.pop %v3078
        %v3110 = vmul.f32 %v3109, 0.6931472
        %v3111 = vlog2.pop %v3080
        %v3112 = vmul.f32 %v3111, 0.6931472
        %v3113 = vsub.f32 %v3001, %v3082
        %v3114 = vsub.f32 %v3002, %v3084
        %v3115 = vsub.f32 %v3003, %v3086
        %v3116 = vsub.f32 %v3004, %v3088
        %v3117 = vsub.f32 %v3005, %v3090
        %v3118 = vsub.f32 %v3006, %v3092
        %v3119 = vsub.f32 %v3007, %v3094
        %v3120 = vsub.f32 %v3008, %v3096
        %v3121 = vsub.f32 %v3009, %v3098
        %v3122 = vsub.f32 %v3010, %v3100
        %v3123 = vsub.f32 %v3011, %v3102
        %v3124 = vsub.f32 %v3012, %v3104
        %v3125 = vsub.f32 %v3013, %v3106
        %v3126 = vsub.f32 %v3014, %v3108
        %v3127 = vsub.f32 %v3015, %v3110
        %v3128 = vsub.f32 %v3016, %v3112
        %3129 = vst [vmem:[%s272] sm:$0xff] %v3113
        %3130 = vst [vmem:[%s272 + $0x8] sm:$0xff] %v3114
        %3131 = vst [vmem:[%s272 + $0x10] sm:$0xff] %v3115
        %3132 = vst [vmem:[%s272 + $0x18] sm:$0xff] %v3116
        %3133 = vst [vmem:[%s272 + $0x20] sm:$0xff] %v3117
        %3134 = vst [vmem:[%s272 + $0x28] sm:$0xff] %v3118
        %3135 = vst [vmem:[%s272 + $0x30] sm:$0xff] %v3119
        %3136 = vst [vmem:[%s272 + $0x38] sm:$0xff] %v3120
        %3137 = vst [vmem:[%s272 + $0x40] sm:$0xff] %v3121
        %3138 = vst [vmem:[%s272 + $0x48] sm:$0xff] %v3122
        %3139 = vst [vmem:[%s272 + $0x50] sm:$0xff] %v3123
        %3140 = vst [vmem:[%s272 + $0x58] sm:$0xff] %v3124
        %3141 = vst [vmem:[%s272 + $0x60] sm:$0xff] %v3125
        %3142 = vst [vmem:[%s272 + $0x68] sm:$0xff] %v3126
        %3143 = vst [vmem:[%s272 + $0x70] sm:$0xff] %v3127
        %3144 = vst [vmem:[%s272 + $0x78] sm:$0xff] %v3128
        %s3145 = sand.u32 %s141, 1
        %s3146 = scalar_lea.sflag [#allocation4], %s3145
        %s3147 = sand.u32 %s141, 1
        %s3148 = smul.addr %s3147, 128
        %s3149 = scalar_lea.vmem [#allocation8], %s3148
        // Predicated region
        $region53: #{tpu_custom_call.1} parent=39 // pred_check
          %p3150 = pneg %p151
        $region54: #{tpu_custom_call.1} parent=39 // pred_check_branch
          %3152 = sbr.rel (%p3150) target = $region56
        $region55: #{tpu_custom_call.1} parent=39 // pred_region
          %s3153 = smul.u32 16, %s23
          %s3155 = ssub.s32 2048, 2048
          %3156 = vsyncadd %s3146, %s3155
          %s3157 = smul.addr %s3153, 128
          %s3158 = scalar_lea.hbm %s5, %s3157
          %s3159 = sshll.u32 %s3149, 4
          %s3160 = int_to_ptr.vmem [resolvable:$true] %s3159
          %3165 = dma.vmem_to_hbm [thread:$0]  %s3160, 2048, %s3158, %s3146, 128, 128, 8
        $region56: #{tpu_custom_call.1} parent=39 // pred_fallthru
          _
      $region40: #{tpu_custom_call.1} parent=5 // pred_fallthru
        _
      %p3166 = scmp.le.s32.totalorder 2, %s18
      // Predicated region
      $region57: #{tpu_custom_call.1} parent=5 // pred_check
        %p3167 = pneg %p3166
      $region58: #{tpu_custom_call.1} parent=5 // pred_check_branch
        %3169 = sbr.rel (%p3167) target = $region60
      $region59: #{tpu_custom_call.1} parent=5 // pred_region
        %s3170 = ssub.s32 %s18, 2
        // Predicated region
        $region61: #{tpu_custom_call.1} parent=59 // pred_check
          %p3171 = pneg %p157
        $region62: #{tpu_custom_call.1} parent=59 // pred_check_branch
          %3173 = sbr.rel (%p3171) target = $region64
        $region63: #{tpu_custom_call.1} parent=59 // pred_region
          %s3174 = sand.u32 %s142, 1
          %s3175 = scalar_lea.sflag [#allocation4], %s3174
          %s3176 = sand.u32 %s142, 1
          %s3177 = smul.addr %s3176, 128
          %s3178 = scalar_lea.vmem [#allocation8], %s3177
          %3179 = dma.done %s3175, 2048
        $region64: #{tpu_custom_call.1} parent=59 // pred_fallthru
          _
      $region60: #{tpu_custom_call.1} parent=5 // pred_fallthru
        _
    $region6: #{tpu_custom_call.1} parent=1 // loop_footer
      %s22 = sadd.s32 1, %s18
    $region7: #{tpu_custom_call.1} parent=1 // loop_footer_branch
      %17 = sbr.rel target = $region3
    $region8: #{tpu_custom_call.1} parent=1 // loop_exit
      _
    %3180 = vsyncpa [#allocation3], 1
    %s3181 = scalar_lea.sflag [#allocation3], 1
    %3182 = vsyncpa %s3181, 1
    %3183 = vsyncpa [#allocation6], 1
    %3184 = vsyncpa [#allocation4], 1
    %s3185 = scalar_lea.sflag [#allocation4], 1
    %3186 = vsyncpa %s3185, 1

</llo_original>
